<compile_context>
chip_gen: v5e
topology: v5e:2x2
jax: 0.10.0
libtpu: 0.0.40
codegen_flags: <defaults>
</compile_context>

<pallas_src>
import numpy as np
import jax
import jax.numpy as jnp
from jax import lax
from jax.experimental import pallas as pl
from jax.experimental.pallas import tpu as pltpu


def _round_up(x: int, m: int) -> int:
    return ((x + m - 1) // m) * m


def _cdiv(a: int, b: int) -> int:
    return -(-a // b)


def _sublane_granularity(*dtypes) -> int:
    """Minimum row-tile multiple given the dtypes that appear in tiled blocks."""
    g = 8
    for dt in dtypes:
        g = max(g, 32 // max(1, np.dtype(dt).itemsize))   # f32->8, bf16->16, int8->32
    return g


def make_actor_kernel(num_gammas, action_dim, ga_pad, base, emit_logits, merged, out_dtype):
    G, A = num_gammas, action_dim
    G_pad = max(8, _round_up(G, 8))      # padded gamma count for clean one-hot matmul shapes

    def actor_kernel(x_ref, w1_ref, b1_ref, w2_ref, b2_ref, *out_refs):
        # ---- 2-layer MLP: bf16 MXU operands, f32 accumulation -------------------------------
        x = x_ref[...].astype(jnp.bfloat16)              # no-op when the producer emits bf16
        h = jnp.dot(x, w1_ref[...], preferred_element_type=jnp.float32) + b1_ref[...]
        h = jnp.where(h > 0, h, 0.01 * h)                # leaky_relu (torch default slope)
        # NOTE: h quantized to bf16 for the second MXU matmul (extra loss vs f32 reference).
        logits = jnp.dot(h.astype(jnp.bfloat16), w2_ref[...],
                         preferred_element_type=jnp.float32) + b2_ref[...]   # (T, ga_pad) f32

        T = logits.shape[0]
        lane = lax.broadcasted_iota(jnp.int32, (T, ga_pad), 1)

        # Segment one-hot matrices (data-independent constants).
        #   seg    (ga_pad, G_pad): sums a gamma's lanes           -> (T, G_pad) on the MXU
        #   expand (G_pad, ga_pad): broadcasts per-gamma scalars back onto that gamma's lanes
        li = lax.broadcasted_iota(jnp.int32, (ga_pad, G_pad), 0)
        gi = lax.broadcasted_iota(jnp.int32, (ga_pad, G_pad), 1)
        lo = gi * A + base
        seg = ((li >= lo) & (li < lo + A) & (gi < G)).astype(jnp.float32)
        gi2 = lax.broadcasted_iota(jnp.int32, (G_pad, ga_pad), 0)
        li2 = lax.broadcasted_iota(jnp.int32, (G_pad, ga_pad), 1)
        lo2 = gi2 * A + base
        expand = ((li2 >= lo2) & (li2 < lo2 + A) & (gi2 < G)).astype(jnp.float32)

        # Per-gamma max: masked full-width max (VPU select + XLU reduce), no sub-vreg slices.
        NEG = jnp.float32(-3.0e38)
        m_full = jnp.zeros((T, ga_pad), jnp.float32)
        for g in range(G):                               # static unroll; G is small
            in_g = (lane >= base + g * A) & (lane < base + (g + 1) * A)
            m_g = jnp.max(jnp.where(in_g, logits, NEG), axis=-1, keepdims=True)
            m_full = jnp.where(in_g, m_g, m_full)

        centered = logits - m_full                       # softmax lanes: <= 0; others unshifted
        e = jnp.exp(centered)                            # ONE full-width EUP exp
        if merged:
            # Zero the raw-logits half before the segment-sum matmul (its exp could overflow).
            e = jnp.where(lane >= base, e, 0.0)

        # Segment sums + per-gamma logsumexp broadcast on the (otherwise idle) MXU.
        sums = jnp.dot(e, seg, preferred_element_type=jnp.float32)            # (T, G_pad)
        lse = jnp.log(jnp.maximum(sums, jnp.float32(1e-30)))                  # pad-gamma safe
        lse_full = jnp.dot(lse, expand, preferred_element_type=jnp.float32)   # (T, ga_pad)
        slab = centered - lse_full
        # merged:     lanes [0:GA] = raw logits, lanes [GA:2GA] = log-softmax, rest 0
        # non-merged: lanes [0:GA] = log-softmax, rest 0

        if emit_logits and not merged:
            out_refs[0][...] = logits.astype(out_dtype)
            out_refs[1][...] = slab.astype(out_dtype)
        else:
            out_refs[0][...] = slab.astype(out_dtype)    # single lane-dense store

    return actor_kernel


def base_actor_head_forward(state, w1, b1, w2, b2, num_gammas, action_dim, *,
                            tile_rows=512, emit_logits=False, out_dtype=jnp.float32):
    """state (B, L, D) -> Categorical log-probs (B, L, G, A); optionally also raw dist_params.

    Perf contract:
      * state may be bf16 (preferred for realistic D) — it is used directly, no wrapper cast.
      * out_dtype=bf16 halves output writeback; default f32 for accuracy.
      * tile_rows=512 targets ~85% of the HBM roofline; the wrapper clamps the tile so there are
        >= 2 grid steps (v7x has two TensorCores) and >= 8 steps once tiles reach 128 rows.
      * Per-step VMEM ~ 2*tile*(D + n_out*128)*bytes + single-buffered weights; budget against
        v7x's 32 MiB scoped default / 64 MiB physical (128 MiB on v5e/v6e).
    """
    B, L, D = state.shape
    D_w, H = w1.shape
    assert D_w == D and w2.shape[0] == H
    G, A = int(num_gammas), int(action_dim)
    GA = G * A
    assert w2.shape[1] == GA

    GA_pad = _round_up(GA, 128)          # lane-dense output slab width
    H_pad = _round_up(H, 128)            # full MXU width for the hidden layer
    merged = bool(emit_logits) and (2 * GA <= GA_pad)
    base = GA if merged else 0

    # ---- pad weights/biases once on the host (zero pad -> contributes nothing) --------------
    b1 = jnp.reshape(b1, (1, H)).astype(jnp.float32)
    b2 = jnp.reshape(b2, (1, GA)).astype(jnp.float32)
    w1p = jnp.pad(w1, ((0, 0), (0, H_pad - H))).astype(jnp.bfloat16)
    b1p = jnp.pad(b1, ((0, 0), (0, H_pad - H)))
    if merged:
        # Duplicate the output projection into lanes [GA:2GA]: the kernel then emits raw logits
        # in lanes [0:GA] and the per-gamma log-softmax in lanes [GA:2GA] of ONE slab (halves
        # output HBM writeback vs two slabs) with zero cross-lane data movement.
        w2p = jnp.zeros((H_pad, GA_pad), jnp.float32)
        w2p = w2p.at[:H, 0:GA].set(w2).at[:H, GA:2 * GA].set(w2)
        w2p = w2p.astype(jnp.bfloat16)
        b2p = jnp.zeros((1, GA_pad), jnp.float32)
        b2p = b2p.at[:, 0:GA].set(b2).at[:, GA:2 * GA].set(b2)
    else:
        w2p = jnp.pad(w2, ((0, H_pad - H), (0, GA_pad - GA))).astype(jnp.bfloat16)
        b2p = jnp.pad(b2, ((0, 0), (0, GA_pad - GA)))

    # ---- row tiling --------------------------------------------------------------------------
    gran = _sublane_granularity(state.dtype, out_dtype)
    N = B * L
    Ng = _round_up(max(N, 1), gran)
    tile = max(gran, (int(tile_rows) // gran) * gran)
    tile = min(tile, Ng)
    if Ng >= 2 * gran:                                   # >= 2 grid steps (v7x: 2 TensorCores)
        tile = min(tile, max(gran, (Ng // 2) // gran * gran))
    if Ng >= 8 * 128:                                    # >= 8 steps once tiles stay >= 128 rows
        tile = min(tile, max(gran, (Ng // 8) // gran * gran))
    N_pad = _round_up(Ng, tile)
    grid = (N_pad // tile,)

    x2d = state.reshape(N, D)
    if N_pad != N:
        x2d = jnp.pad(x2d, ((0, N_pad - N), (0, 0)))

    kernel = make_actor_kernel(G, A, GA_pad, base, emit_logits, merged, out_dtype)

    n_out = 2 if (emit_logits and not merged) else 1
    out_shapes = tuple(jax.ShapeDtypeStruct((N_pad, GA_pad), out_dtype) for _ in range(n_out))
    out_specs = [pl.BlockSpec((tile, GA_pad), lambda i: (i, 0)) for _ in range(n_out)]

    out_itemsize = np.dtype(out_dtype).itemsize
    cost = pl.CostEstimate(
        flops=int(2 * N_pad * (D * H_pad + H_pad * GA_pad)),
        transcendentals=int(N_pad * (GA_pad + 8)),
        bytes_accessed=int(x2d.size * x2d.dtype.itemsize
                           + w1p.size * 2 + w2p.size * 2 + b1p.size * 4 + b2p.size * 4
                           + n_out * N_pad * GA_pad * out_itemsize))

    def _in_specs(single_buffer_weights):
        kw = dict(pipeline_mode=pl.Buffered(1)) if single_buffer_weights else {}
        return [
            pl.BlockSpec((tile, D), lambda i: (i, 0)),              # state rows (only tiled input)
            pl.BlockSpec((D, H_pad), lambda i: (0, 0), **kw),       # W1 (grid-resident)
            pl.BlockSpec((1, H_pad), lambda i: (0, 0), **kw),       # b1
            pl.BlockSpec((H_pad, GA_pad), lambda i: (0, 0), **kw),  # W2 (lane-padded / duplicated)
            pl.BlockSpec((1, GA_pad), lambda i: (0, 0), **kw),      # b2
        ]

    def _run(single_buffer_weights):
        return pl.pallas_call(
            kernel,
            out_shape=out_shapes,
            grid_spec=pltpu.PrefetchScalarGridSpec(
                num_scalar_prefetch=0,
                grid=grid,
                in_specs=_in_specs(single_buffer_weights),
                out_specs=out_specs,
            ),
            compiler_params=pltpu.CompilerParams(dimension_semantics=("parallel",)),
            cost_estimate=cost,
        )(x2d, w1p, b1p, w2p, b2p)

    try:
        outs = _run(True)       # constant-index weight blocks single-buffered (halves their VMEM)
    except Exception:           # graceful fallback if this Pallas version lacks pipeline_mode
        outs = _run(False)

    # ---- slice off padding and reshape to (B, L, G, A) ---------------------------------------
    if not emit_logits:
        (slab,) = outs
        return slab[:N, :GA].reshape(B, L, G, A)
    if merged:
        (slab,) = outs
        dist_params = slab[:N, :GA].reshape(B, L, G, A)
        log_probs = slab[:N, GA:2 * GA].reshape(B, L, G, A)
    else:
        logits2d, logp2d = outs
        dist_params = logits2d[:N, :GA].reshape(B, L, G, A)
        log_probs = logp2d[:N, :GA].reshape(B, L, G, A)
    return dist_params, log_probs


def _reference(state, w1, b1, w2, b2, num_gammas, action_dim):
    B, L, D = state.shape
    x = state.reshape(B * L, D).astype(jnp.float32)
    h = x @ w1 + jnp.reshape(b1, (1, -1))
    h = jnp.where(h > 0, h, 0.01 * h)
    logits = (h @ w2 + jnp.reshape(b2, (1, -1))).reshape(B, L, num_gammas, action_dim)
    logp = jax.nn.log_softmax(logits, axis=-1)
    return logits, logp


if __name__ == "__main__":
    # Small, deterministic config consistent with the module's forward contract:
    # state (B, L, state_dim); dist_params (B, L, num_gammas, action_dim); discrete policy.
    B, L = 2, 8
    state_dim = 32
    hidden = 32
    num_gammas = 3
    action_dim = 6          # policy_dist.input_dimension for Discrete == action_dim
    GA = num_gammas * action_dim

    key = jax.random.PRNGKey(0)
    k_state, k_w1, k_b1, k_w2, k_b2 = jax.random.split(key, 5)

    state = jax.random.normal(k_state, (B, L, state_dim), dtype=jnp.float32)
    w1 = jax.random.normal(k_w1, (state_dim, hidden), dtype=jnp.float32) * 0.1
    b1 = jax.random.normal(k_b1, (1, hidden), dtype=jnp.float32) * 0.01
    w2 = jax.random.normal(k_w2, (hidden, GA), dtype=jnp.float32) * 0.1
    b2 = jax.random.normal(k_b2, (1, GA), dtype=jnp.float32) * 0.01

    ref_logits, ref_logp = _reference(state, w1, b1, w2, b2, num_gammas, action_dim)

    # 1) emit_logits=True: single merged (rows, 128) slab carrying dist_params + log-probs.
    dist_params, log_probs = base_actor_head_forward(
        state, w1, b1, w2, b2, num_gammas, action_dim, emit_logits=True)
    jax.block_until_ready((dist_params, log_probs))
    assert dist_params.shape == (B, L, num_gammas, action_dim)
    assert log_probs.shape == (B, L, num_gammas, action_dim)
    # bf16 MXU operands with f32 accumulation -> slightly looser tolerance than pure f32.
    assert jnp.allclose(dist_params, ref_logits, atol=2e-2, rtol=2e-2)
    assert jnp.allclose(log_probs, ref_logp, atol=2e-2, rtol=2e-2)
    # Sanity: per-(B, L, gamma) Categorical probabilities sum to ~1 (tolerance covers the
    # precision of the f32 segment-sum matmuls; the Categorical renormalizes anyway).
    assert jnp.allclose(jnp.exp(log_probs).sum(-1), 1.0, atol=2e-2)

    # 2) Default traffic-lean path: normalized log-probs only (one writeback stream).
    logp_only = base_actor_head_forward(state, w1, b1, w2, b2, num_gammas, action_dim)
    jax.block_until_ready(logp_only)
    assert logp_only.shape == (B, L, num_gammas, action_dim)
    assert jnp.allclose(logp_only, log_probs, atol=1e-5)

    # 3) Low-traffic contract: bf16 state from the upstream producer + bf16 output slab.
    logp_bf16 = base_actor_head_forward(
        state.astype(jnp.bfloat16), w1, b1, w2, b2, num_gammas, action_dim,
        out_dtype=jnp.bfloat16)
    jax.block_until_ready(logp_bf16)
    assert logp_bf16.dtype == jnp.bfloat16
    assert jnp.allclose(logp_bf16.astype(jnp.float32), ref_logp, atol=6e-2, rtol=6e-2)

    print("KERNEL_OK")
</pallas_src>

<mosaic_0001>
module attributes {stable_mosaic.version = 11 : i64} {
  func.func @actor_kernel(%arg0: i32, %arg1: memref<8x32xf32, #tpu.memory_space<vmem>>, %arg2: memref<32x128xbf16, #tpu.memory_space<vmem>>, %arg3: memref<1x128xf32, #tpu.memory_space<vmem>>, %arg4: memref<128x128xbf16, #tpu.memory_space<vmem>>, %arg5: memref<1x128xf32, #tpu.memory_space<vmem>>, %arg6: memref<8x128xf32, #tpu.memory_space<vmem>>) attributes {dimension_semantics = [#tpu.dimension_semantics<parallel>], iteration_bounds = array<i64: 2>, scalar_prefetch = 0 : i64, scratch_operands = 0 : i64, tpu.core_type = #tpu.core_type<tc>, window_params = [{transform_indices = @transform_0, window_bounds = array<i64: 8, 32>}, {pipeline_mode = #tpu.pipeline_mode<synchronous>, transform_indices = @transform_1, window_bounds = array<i64: 32, 128>}, {pipeline_mode = #tpu.pipeline_mode<synchronous>, transform_indices = @transform_2, window_bounds = array<i64: 1, 128>}, {pipeline_mode = #tpu.pipeline_mode<synchronous>, transform_indices = @transform_3, window_bounds = array<i64: 128, 128>}, {pipeline_mode = #tpu.pipeline_mode<synchronous>, transform_indices = @transform_4, window_bounds = array<i64: 1, 128>}, {transform_indices = @transform_5, window_bounds = array<i64: 8, 128>}]} {
    %c0 = arith.constant 0 : index
    %c0_0 = arith.constant 0 : index
    %0 = vector.load %arg1[%c0, %c0_0] : memref<8x32xf32, #tpu.memory_space<vmem>>, vector<8x32xf32>
    %1 = arith.truncf %0 : vector<8x32xf32> to vector<8x32xbf16>
    %c0_1 = arith.constant 0 : index
    %c0_2 = arith.constant 0 : index
    %2 = vector.load %arg2[%c0_1, %c0_2] : memref<32x128xbf16, #tpu.memory_space<vmem>>, vector<32x128xbf16>
    %cst = arith.constant dense<0.000000e+00> : vector<8x128xf32>
    %3 = tpu.matmul %1, %2, %cst {dimension_numbers = #tpu.dot_dimension_numbers<[1], [0], [0], [1], [0, 0, 1, 1], [], []>} : vector<8x32xbf16>, vector<32x128xbf16>, vector<8x128xf32> -> vector<8x128xf32>
    %c0_3 = arith.constant 0 : index
    %c0_4 = arith.constant 0 : index
    %4 = vector.load %arg3[%c0_3, %c0_4] : memref<1x128xf32, #tpu.memory_space<vmem>>, vector<1x128xf32>
    %5 = vector.broadcast %4 : vector<1x128xf32> to vector<8x128xf32>
    %6 = arith.addf %3, %5 : vector<8x128xf32>
    %cst_5 = arith.constant 0.000000e+00 : f32
    %7 = vector.broadcast %cst_5 : f32 to vector<8x128xf32>
    %8 = arith.cmpf ogt, %6, %7 : vector<8x128xf32>
    %cst_6 = arith.constant 0.00999999977 : f32
    %9 = vector.broadcast %cst_6 : f32 to vector<8x128xf32>
    %10 = arith.mulf %9, %6 : vector<8x128xf32>
    %11 = arith.select %8, %6, %10 : vector<8x128xi1>, vector<8x128xf32>
    %12 = arith.truncf %11 : vector<8x128xf32> to vector<8x128xbf16>
    %c0_7 = arith.constant 0 : index
    %c0_8 = arith.constant 0 : index
    %13 = vector.load %arg4[%c0_7, %c0_8] : memref<128x128xbf16, #tpu.memory_space<vmem>>, vector<128x128xbf16>
    %cst_9 = arith.constant dense<0.000000e+00> : vector<8x128xf32>
    %14 = tpu.matmul %12, %13, %cst_9 {dimension_numbers = #tpu.dot_dimension_numbers<[1], [0], [0], [1], [0, 0, 1, 1], [], []>} : vector<8x128xbf16>, vector<128x128xbf16>, vector<8x128xf32> -> vector<8x128xf32>
    %c0_10 = arith.constant 0 : index
    %c0_11 = arith.constant 0 : index
    %15 = vector.load %arg5[%c0_10, %c0_11] : memref<1x128xf32, #tpu.memory_space<vmem>>, vector<1x128xf32>
    %16 = vector.broadcast %15 : vector<1x128xf32> to vector<8x128xf32>
    %17 = arith.addf %14, %16 : vector<8x128xf32>
    %18 = tpu.iota {dimensions = array<i32: 1>} : vector<8x128xi32>
    %19 = tpu.iota {dimensions = array<i32: 0>} : vector<128x8xi32>
    %20 = tpu.iota {dimensions = array<i32: 1>} : vector<128x8xi32>
    %c6_i32 = arith.constant 6 : i32
    %21 = vector.broadcast %c6_i32 : i32 to vector<128x8xi32>
    %22 = arith.muli %20, %21 : vector<128x8xi32>
    %c18_i32 = arith.constant 18 : i32
    %23 = vector.broadcast %c18_i32 : i32 to vector<128x8xi32>
    %24 = arith.addi %22, %23 : vector<128x8xi32>
    %25 = arith.cmpi sge, %19, %24 : vector<128x8xi32>
    %c6_i32_12 = arith.constant 6 : i32
    %26 = vector.broadcast %c6_i32_12 : i32 to vector<128x8xi32>
    %27 = arith.addi %24, %26 : vector<128x8xi32>
    %28 = arith.cmpi slt, %19, %27 : vector<128x8xi32>
    %29 = arith.andi %25, %28 : vector<128x8xi1>
    %c3_i32 = arith.constant 3 : i32
    %30 = vector.broadcast %c3_i32 : i32 to vector<128x8xi32>
    %31 = arith.cmpi slt, %20, %30 : vector<128x8xi32>
    %32 = arith.andi %29, %31 : vector<128x8xi1>
    %33 = arith.extui %32 : vector<128x8xi1> to vector<128x8xi32>
    %34 = arith.sitofp %33 : vector<128x8xi32> to vector<128x8xf32>
    %35 = tpu.iota {dimensions = array<i32: 0>} : vector<8x128xi32>
    %36 = tpu.iota {dimensions = array<i32: 1>} : vector<8x128xi32>
    %c6_i32_13 = arith.constant 6 : i32
    %37 = vector.broadcast %c6_i32_13 : i32 to vector<8x128xi32>
    %38 = arith.muli %35, %37 : vector<8x128xi32>
    %c18_i32_14 = arith.constant 18 : i32
    %39 = vector.broadcast %c18_i32_14 : i32 to vector<8x128xi32>
    %40 = arith.addi %38, %39 : vector<8x128xi32>
    %41 = arith.cmpi sge, %36, %40 : vector<8x128xi32>
    %c6_i32_15 = arith.constant 6 : i32
    %42 = vector.broadcast %c6_i32_15 : i32 to vector<8x128xi32>
    %43 = arith.addi %40, %42 : vector<8x128xi32>
    %44 = arith.cmpi slt, %36, %43 : vector<8x128xi32>
    %45 = arith.andi %41, %44 : vector<8x128xi1>
    %c3_i32_16 = arith.constant 3 : i32
    %46 = vector.broadcast %c3_i32_16 : i32 to vector<8x128xi32>
    %47 = arith.cmpi slt, %35, %46 : vector<8x128xi32>
    %48 = arith.andi %45, %47 : vector<8x128xi1>
    %49 = arith.extui %48 : vector<8x128xi1> to vector<8x128xi32>
    %50 = arith.sitofp %49 : vector<8x128xi32> to vector<8x128xf32>
    %cst_17 = arith.constant 0.000000e+00 : f32
    %51 = vector.broadcast %cst_17 : f32 to vector<8x128xf32>
    %c18_i32_18 = arith.constant 18 : i32
    %52 = vector.broadcast %c18_i32_18 : i32 to vector<8x128xi32>
    %53 = arith.cmpi sge, %18, %52 : vector<8x128xi32>
    %c24_i32 = arith.constant 24 : i32
    %54 = vector.broadcast %c24_i32 : i32 to vector<8x128xi32>
    %55 = arith.cmpi slt, %18, %54 : vector<8x128xi32>
    %56 = arith.andi %53, %55 : vector<8x128xi1>
    %cst_19 = arith.constant -3.000000e+38 : f32
    %57 = vector.broadcast %cst_19 : f32 to vector<8x128xf32>
    %58 = arith.select %56, %17, %57 : vector<8x128xi1>, vector<8x128xf32>
    %cst_20 = arith.constant dense<0xFF800000> : vector<8xf32>
    %59 = vector.multi_reduction <maximumf>, %58, %cst_20 [1] : vector<8x128xf32> to vector<8xf32>
    %60 = vector.shape_cast %59 : vector<8xf32> to vector<8x1xf32>
    %61 = vector.shape_cast %60 : vector<8x1xf32> to vector<8x1xf32>
    %62 = vector.broadcast %61 : vector<8x1xf32> to vector<8x128xf32>
    %63 = arith.select %56, %62, %51 : vector<8x128xi1>, vector<8x128xf32>
    %c24_i32_21 = arith.constant 24 : i32
    %64 = vector.broadcast %c24_i32_21 : i32 to vector<8x128xi32>
    %65 = arith.cmpi sge, %18, %64 : vector<8x128xi32>
    %c30_i32 = arith.constant 30 : i32
    %66 = vector.broadcast %c30_i32 : i32 to vector<8x128xi32>
    %67 = arith.cmpi slt, %18, %66 : vector<8x128xi32>
    %68 = arith.andi %65, %67 : vector<8x128xi1>
    %cst_22 = arith.constant -3.000000e+38 : f32
    %69 = vector.broadcast %cst_22 : f32 to vector<8x128xf32>
    %70 = arith.select %68, %17, %69 : vector<8x128xi1>, vector<8x128xf32>
    %cst_23 = arith.constant dense<0xFF800000> : vector<8xf32>
    %71 = vector.multi_reduction <maximumf>, %70, %cst_23 [1] : vector<8x128xf32> to vector<8xf32>
    %72 = vector.shape_cast %71 : vector<8xf32> to vector<8x1xf32>
    %73 = vector.shape_cast %72 : vector<8x1xf32> to vector<8x1xf32>
    %74 = vector.broadcast %73 : vector<8x1xf32> to vector<8x128xf32>
    %75 = arith.select %68, %74, %63 : vector<8x128xi1>, vector<8x128xf32>
    %c30_i32_24 = arith.constant 30 : i32
    %76 = vector.broadcast %c30_i32_24 : i32 to vector<8x128xi32>
    %77 = arith.cmpi sge, %18, %76 : vector<8x128xi32>
    %c36_i32 = arith.constant 36 : i32
    %78 = vector.broadcast %c36_i32 : i32 to vector<8x128xi32>
    %79 = arith.cmpi slt, %18, %78 : vector<8x128xi32>
    %80 = arith.andi %77, %79 : vector<8x128xi1>
    %cst_25 = arith.constant -3.000000e+38 : f32
    %81 = vector.broadcast %cst_25 : f32 to vector<8x128xf32>
    %82 = arith.select %80, %17, %81 : vector<8x128xi1>, vector<8x128xf32>
    %cst_26 = arith.constant dense<0xFF800000> : vector<8xf32>
    %83 = vector.multi_reduction <maximumf>, %82, %cst_26 [1] : vector<8x128xf32> to vector<8xf32>
    %84 = vector.shape_cast %83 : vector<8xf32> to vector<8x1xf32>
    %85 = vector.shape_cast %84 : vector<8x1xf32> to vector<8x1xf32>
    %86 = vector.broadcast %85 : vector<8x1xf32> to vector<8x128xf32>
    %87 = arith.select %80, %86, %75 : vector<8x128xi1>, vector<8x128xf32>
    %88 = arith.subf %17, %87 : vector<8x128xf32>
    %89 = math.exp %88 : vector<8x128xf32>
    %c18_i32_27 = arith.constant 18 : i32
    %90 = vector.broadcast %c18_i32_27 : i32 to vector<8x128xi32>
    %91 = arith.cmpi sge, %18, %90 : vector<8x128xi32>
    %cst_28 = arith.constant 0.000000e+00 : f32
    %92 = vector.broadcast %cst_28 : f32 to vector<8x128xf32>
    %93 = arith.select %91, %89, %92 : vector<8x128xi1>, vector<8x128xf32>
    %cst_29 = arith.constant dense<0.000000e+00> : vector<8x8xf32>
    %94 = tpu.matmul %93, %34, %cst_29 {dimension_numbers = #tpu.dot_dimension_numbers<[1], [0], [0], [1], [0, 0, 1, 1], [], []>} : vector<8x128xf32>, vector<128x8xf32>, vector<8x8xf32> -> vector<8x8xf32>
    %cst_30 = arith.constant 1.000000e-30 : f32
    %95 = vector.broadcast %cst_30 : f32 to vector<8x8xf32>
    %96 = arith.maximumf %94, %95 : vector<8x8xf32>
    %97 = math.log %96 : vector<8x8xf32>
    %cst_31 = arith.constant dense<0.000000e+00> : vector<8x128xf32>
    %98 = tpu.matmul %97, %50, %cst_31 {dimension_numbers = #tpu.dot_dimension_numbers<[1], [0], [0], [1], [0, 0, 1, 1], [], []>} : vector<8x8xf32>, vector<8x128xf32>, vector<8x128xf32> -> vector<8x128xf32>
    %99 = arith.subf %88, %98 : vector<8x128xf32>
    %c0_32 = arith.constant 0 : index
    %c0_33 = arith.constant 0 : index
    %100 = vector.load %arg6[%c0_32, %c0_33] : memref<8x128xf32, #tpu.memory_space<vmem>>, vector<8x128xf32>
    tpu.vector_store %arg6[%c0_32, %c0_33], %99 {strides = array<i32>} : memref<8x128xf32, #tpu.memory_space<vmem>>, vector<8x128xf32>,
    return
  }
  func.func @transform_0(%arg0: i32) -> (i32, i32) {
    %c0_i32 = arith.constant 0 : i32
    %c0_i32_0 = arith.constant 0 : i32
    return %arg0, %c0_i32 : i32, i32
  }
  func.func @transform_1(%arg0: i32) -> (i32, i32) {
    %c0_i32 = arith.constant 0 : i32
    %c0_i32_0 = arith.constant 0 : i32
    %c0_i32_1 = arith.constant 0 : i32
    return %c0_i32, %c0_i32_0 : i32, i32
  }
  func.func @transform_2(%arg0: i32) -> (i32, i32) {
    %c0_i32 = arith.constant 0 : i32
    %c0_i32_0 = arith.constant 0 : i32
    %c0_i32_1 = arith.constant 0 : i32
    return %c0_i32, %c0_i32_0 : i32, i32
  }
  func.func @transform_3(%arg0: i32) -> (i32, i32) {
    %c0_i32 = arith.constant 0 : i32
    %c0_i32_0 = arith.constant 0 : i32
    %c0_i32_1 = arith.constant 0 : i32
    return %c0_i32, %c0_i32_0 : i32, i32
  }
  func.func @transform_4(%arg0: i32) -> (i32, i32) {
    %c0_i32 = arith.constant 0 : i32
    %c0_i32_0 = arith.constant 0 : i32
    %c0_i32_1 = arith.constant 0 : i32
    return %c0_i32, %c0_i32_0 : i32, i32
  }
  func.func @transform_5(%arg0: i32) -> (i32, i32) {
    %c0_i32 = arith.constant 0 : i32
    %c0_i32_0 = arith.constant 0 : i32
    return %arg0, %c0_i32 : i32, i32
  }
}

module attributes {stable_mosaic.version = 11 : i64} {
  func.func @actor_kernel(%arg0: i32, %arg1: memref<8x32xf32, #tpu.memory_space<vmem>>, %arg2: memref<32x128xbf16, #tpu.memory_space<vmem>>, %arg3: memref<1x128xf32, #tpu.memory_space<vmem>>, %arg4: memref<128x128xbf16, #tpu.memory_space<vmem>>, %arg5: memref<1x128xf32, #tpu.memory_space<vmem>>, %arg6: memref<8x128xf32, #tpu.memory_space<vmem>>) attributes {dimension_semantics = [#tpu.dimension_semantics<parallel>], iteration_bounds = array<i64: 2>, scalar_prefetch = 0 : i64, scratch_operands = 0 : i64, tpu.core_type = #tpu.core_type<tc>, window_params = [{transform_indices = @transform_0, window_bounds = array<i64: 8, 32>}, {pipeline_mode = #tpu.pipeline_mode<synchronous>, transform_indices = @transform_1, window_bounds = array<i64: 32, 128>}, {pipeline_mode = #tpu.pipeline_mode<synchronous>, transform_indices = @transform_2, window_bounds = array<i64: 1, 128>}, {pipeline_mode = #tpu.pipeline_mode<synchronous>, transform_indices = @transform_3, window_bounds = array<i64: 128, 128>}, {pipeline_mode = #tpu.pipeline_mode<synchronous>, transform_indices = @transform_4, window_bounds = array<i64: 1, 128>}, {transform_indices = @transform_5, window_bounds = array<i64: 8, 128>}]} {
    %c0 = arith.constant 0 : index
    %c0_0 = arith.constant 0 : index
    %0 = vector.load %arg1[%c0, %c0_0] : memref<8x32xf32, #tpu.memory_space<vmem>>, vector<8x32xf32>
    %1 = arith.truncf %0 : vector<8x32xf32> to vector<8x32xbf16>
    %c0_1 = arith.constant 0 : index
    %c0_2 = arith.constant 0 : index
    %2 = vector.load %arg2[%c0_1, %c0_2] : memref<32x128xbf16, #tpu.memory_space<vmem>>, vector<32x128xbf16>
    %cst = arith.constant dense<0.000000e+00> : vector<8x128xf32>
    %3 = tpu.matmul %1, %2, %cst {dimension_numbers = #tpu.dot_dimension_numbers<[1], [0], [0], [1], [0, 0, 1, 1], [], []>} : vector<8x32xbf16>, vector<32x128xbf16>, vector<8x128xf32> -> vector<8x128xf32>
    %c0_3 = arith.constant 0 : index
    %c0_4 = arith.constant 0 : index
    %4 = vector.load %arg3[%c0_3, %c0_4] : memref<1x128xf32, #tpu.memory_space<vmem>>, vector<1x128xf32>
    %5 = vector.broadcast %4 : vector<1x128xf32> to vector<8x128xf32>
    %6 = arith.addf %3, %5 : vector<8x128xf32>
    %cst_5 = arith.constant 0.000000e+00 : f32
    %7 = vector.broadcast %cst_5 : f32 to vector<8x128xf32>
    %8 = arith.cmpf ogt, %6, %7 : vector<8x128xf32>
    %cst_6 = arith.constant 0.00999999977 : f32
    %9 = vector.broadcast %cst_6 : f32 to vector<8x128xf32>
    %10 = arith.mulf %9, %6 : vector<8x128xf32>
    %11 = arith.select %8, %6, %10 : vector<8x128xi1>, vector<8x128xf32>
    %12 = arith.truncf %11 : vector<8x128xf32> to vector<8x128xbf16>
    %c0_7 = arith.constant 0 : index
    %c0_8 = arith.constant 0 : index
    %13 = vector.load %arg4[%c0_7, %c0_8] : memref<128x128xbf16, #tpu.memory_space<vmem>>, vector<128x128xbf16>
    %cst_9 = arith.constant dense<0.000000e+00> : vector<8x128xf32>
    %14 = tpu.matmul %12, %13, %cst_9 {dimension_numbers = #tpu.dot_dimension_numbers<[1], [0], [0], [1], [0, 0, 1, 1], [], []>} : vector<8x128xbf16>, vector<128x128xbf16>, vector<8x128xf32> -> vector<8x128xf32>
    %c0_10 = arith.constant 0 : index
    %c0_11 = arith.constant 0 : index
    %15 = vector.load %arg5[%c0_10, %c0_11] : memref<1x128xf32, #tpu.memory_space<vmem>>, vector<1x128xf32>
    %16 = vector.broadcast %15 : vector<1x128xf32> to vector<8x128xf32>
    %17 = arith.addf %14, %16 : vector<8x128xf32>
    %18 = tpu.iota {dimensions = array<i32: 1>} : vector<8x128xi32>
    %19 = tpu.iota {dimensions = array<i32: 0>} : vector<128x8xi32>
    %20 = tpu.iota {dimensions = array<i32: 1>} : vector<128x8xi32>
    %c6_i32 = arith.constant 6 : i32
    %21 = vector.broadcast %c6_i32 : i32 to vector<128x8xi32>
    %22 = arith.muli %20, %21 : vector<128x8xi32>
    %c18_i32 = arith.constant 18 : i32
    %23 = vector.broadcast %c18_i32 : i32 to vector<128x8xi32>
    %24 = arith.addi %22, %23 : vector<128x8xi32>
    %25 = arith.cmpi sge, %19, %24 : vector<128x8xi32>
    %c6_i32_12 = arith.constant 6 : i32
    %26 = vector.broadcast %c6_i32_12 : i32 to vector<128x8xi32>
    %27 = arith.addi %24, %26 : vector<128x8xi32>
    %28 = arith.cmpi slt, %19, %27 : vector<128x8xi32>
    %29 = arith.andi %25, %28 : vector<128x8xi1>
    %c3_i32 = arith.constant 3 : i32
    %30 = vector.broadcast %c3_i32 : i32 to vector<128x8xi32>
    %31 = arith.cmpi slt, %20, %30 : vector<128x8xi32>
    %32 = arith.andi %29, %31 : vector<128x8xi1>
    %33 = arith.extui %32 : vector<128x8xi1> to vector<128x8xi32>
    %34 = arith.sitofp %33 : vector<128x8xi32> to vector<128x8xf32>
    %35 = tpu.iota {dimensions = array<i32: 0>} : vector<8x128xi32>
    %36 = tpu.iota {dimensions = array<i32: 1>} : vector<8x128xi32>
    %c6_i32_13 = arith.constant 6 : i32
    %37 = vector.broadcast %c6_i32_13 : i32 to vector<8x128xi32>
    %38 = arith.muli %35, %37 : vector<8x128xi32>
    %c18_i32_14 = arith.constant 18 : i32
    %39 = vector.broadcast %c18_i32_14 : i32 to vector<8x128xi32>
    %40 = arith.addi %38, %39 : vector<8x128xi32>
    %41 = arith.cmpi sge, %36, %40 : vector<8x128xi32>
    %c6_i32_15 = arith.constant 6 : i32
    %42 = vector.broadcast %c6_i32_15 : i32 to vector<8x128xi32>
    %43 = arith.addi %40, %42 : vector<8x128xi32>
    %44 = arith.cmpi slt, %36, %43 : vector<8x128xi32>
    %45 = arith.andi %41, %44 : vector<8x128xi1>
    %c3_i32_16 = arith.constant 3 : i32
    %46 = vector.broadcast %c3_i32_16 : i32 to vector<8x128xi32>
    %47 = arith.cmpi slt, %35, %46 : vector<8x128xi32>
    %48 = arith.andi %45, %47 : vector<8x128xi1>
    %49 = arith.extui %48 : vector<8x128xi1> to vector<8x128xi32>
    %50 = arith.sitofp %49 : vector<8x128xi32> to vector<8x128xf32>
    %cst_17 = arith.constant 0.000000e+00 : f32
    %51 = vector.broadcast %cst_17 : f32 to vector<8x128xf32>
    %c18_i32_18 = arith.constant 18 : i32
    %52 = vector.broadcast %c18_i32_18 : i32 to vector<8x128xi32>
    %53 = arith.cmpi sge, %18, %52 : vector<8x128xi32>
    %c24_i32 = arith.constant 24 : i32
    %54 = vector.broadcast %c24_i32 : i32 to vector<8x128xi32>
    %55 = arith.cmpi slt, %18, %54 : vector<8x128xi32>
    %56 = arith.andi %53, %55 : vector<8x128xi1>
    %cst_19 = arith.constant -3.000000e+38 : f32
    %57 = vector.broadcast %cst_19 : f32 to vector<8x128xf32>
    %58 = arith.select %56, %17, %57 : vector<8x128xi1>, vector<8x128xf32>
    %cst_20 = arith.constant dense<0xFF800000> : vector<8xf32>
    %59 = vector.multi_reduction <maximumf>, %58, %cst_20 [1] : vector<8x128xf32> to vector<8xf32>
    %60 = vector.shape_cast %59 : vector<8xf32> to vector<8x1xf32>
    %61 = vector.shape_cast %60 : vector<8x1xf32> to vector<8x1xf32>
    %62 = vector.broadcast %61 : vector<8x1xf32> to vector<8x128xf32>
    %63 = arith.select %56, %62, %51 : vector<8x128xi1>, vector<8x128xf32>
    %c24_i32_21 = arith.constant 24 : i32
    %64 = vector.broadcast %c24_i32_21 : i32 to vector<8x128xi32>
    %65 = arith.cmpi sge, %18, %64 : vector<8x128xi32>
    %c30_i32 = arith.constant 30 : i32
    %66 = vector.broadcast %c30_i32 : i32 to vector<8x128xi32>
    %67 = arith.cmpi slt, %18, %66 : vector<8x128xi32>
    %68 = arith.andi %65, %67 : vector<8x128xi1>
    %cst_22 = arith.constant -3.000000e+38 : f32
    %69 = vector.broadcast %cst_22 : f32 to vector<8x128xf32>
    %70 = arith.select %68, %17, %69 : vector<8x128xi1>, vector<8x128xf32>
    %cst_23 = arith.constant dense<0xFF800000> : vector<8xf32>
    %71 = vector.multi_reduction <maximumf>, %70, %cst_23 [1] : vector<8x128xf32> to vector<8xf32>
    %72 = vector.shape_cast %71 : vector<8xf32> to vector<8x1xf32>
    %73 = vector.shape_cast %72 : vector<8x1xf32> to vector<8x1xf32>
    %74 = vector.broadcast %73 : vector<8x1xf32> to vector<8x128xf32>
    %75 = arith.select %68, %74, %63 : vector<8x128xi1>, vector<8x128xf32>
    %c30_i32_24 = arith.constant 30 : i32
    %76 = vector.broadcast %c30_i32_24 : i32 to vector<8x128xi32>
    %77 = arith.cmpi sge, %18, %76 : vector<8x128xi32>
    %c36_i32 = arith.constant 36 : i32
    %78 = vector.broadcast %c36_i32 : i32 to vector<8x128xi32>
    %79 = arith.cmpi slt, %18, %78 : vector<8x128xi32>
    %80 = arith.andi %77, %79 : vector<8x128xi1>
    %cst_25 = arith.constant -3.000000e+38 : f32
    %81 = vector.broadcast %cst_25 : f32 to vector<8x128xf32>
    %82 = arith.select %80, %17, %81 : vector<8x128xi1>, vector<8x128xf32>
    %cst_26 = arith.constant dense<0xFF800000> : vector<8xf32>
    %83 = vector.multi_reduction <maximumf>, %82, %cst_26 [1] : vector<8x128xf32> to vector<8xf32>
    %84 = vector.shape_cast %83 : vector<8xf32> to vector<8x1xf32>
    %85 = vector.shape_cast %84 : vector<8x1xf32> to vector<8x1xf32>
    %86 = vector.broadcast %85 : vector<8x1xf32> to vector<8x128xf32>
    %87 = arith.select %80, %86, %75 : vector<8x128xi1>, vector<8x128xf32>
    %88 = arith.subf %17, %87 : vector<8x128xf32>
    %89 = math.exp %88 : vector<8x128xf32>
    %c18_i32_27 = arith.constant 18 : i32
    %90 = vector.broadcast %c18_i32_27 : i32 to vector<8x128xi32>
    %91 = arith.cmpi sge, %18, %90 : vector<8x128xi32>
    %cst_28 = arith.constant 0.000000e+00 : f32
    %92 = vector.broadcast %cst_28 : f32 to vector<8x128xf32>
    %93 = arith.select %91, %89, %92 : vector<8x128xi1>, vector<8x128xf32>
    %cst_29 = arith.constant dense<0.000000e+00> : vector<8x8xf32>
    %94 = tpu.matmul %93, %34, %cst_29 {dimension_numbers = #tpu.dot_dimension_numbers<[1], [0], [0], [1], [0, 0, 1, 1], [], []>} : vector<8x128xf32>, vector<128x8xf32>, vector<8x8xf32> -> vector<8x8xf32>
    %cst_30 = arith.constant 1.000000e-30 : f32
    %95 = vector.broadcast %cst_30 : f32 to vector<8x8xf32>
    %96 = arith.maximumf %94, %95 : vector<8x8xf32>
    %97 = math.log %96 : vector<8x8xf32>
    %cst_31 = arith.constant dense<0.000000e+00> : vector<8x128xf32>
    %98 = tpu.matmul %97, %50, %cst_31 {dimension_numbers = #tpu.dot_dimension_numbers<[1], [0], [0], [1], [0, 0, 1, 1], [], []>} : vector<8x8xf32>, vector<8x128xf32>, vector<8x128xf32> -> vector<8x128xf32>
    %99 = arith.subf %88, %98 : vector<8x128xf32>
    %c0_32 = arith.constant 0 : index
    %c0_33 = arith.constant 0 : index
    %100 = vector.load %arg6[%c0_32, %c0_33] : memref<8x128xf32, #tpu.memory_space<vmem>>, vector<8x128xf32>
    tpu.vector_store %arg6[%c0_32, %c0_33], %99 {strides = array<i32>} : memref<8x128xf32, #tpu.memory_space<vmem>>, vector<8x128xf32>,
    return
  }
  func.func @transform_0(%arg0: i32) -> (i32, i32) {
    %c0_i32 = arith.constant 0 : i32
    %c0_i32_0 = arith.constant 0 : i32
    return %arg0, %c0_i32 : i32, i32
  }
  func.func @transform_1(%arg0: i32) -> (i32, i32) {
    %c0_i32 = arith.constant 0 : i32
    %c0_i32_0 = arith.constant 0 : i32
    %c0_i32_1 = arith.constant 0 : i32
    return %c0_i32, %c0_i32_0 : i32, i32
  }
  func.func @transform_2(%arg0: i32) -> (i32, i32) {
    %c0_i32 = arith.constant 0 : i32
    %c0_i32_0 = arith.constant 0 : i32
    %c0_i32_1 = arith.constant 0 : i32
    return %c0_i32, %c0_i32_0 : i32, i32
  }
  func.func @transform_3(%arg0: i32) -> (i32, i32) {
    %c0_i32 = arith.constant 0 : i32
    %c0_i32_0 = arith.constant 0 : i32
    %c0_i32_1 = arith.constant 0 : i32
    return %c0_i32, %c0_i32_0 : i32, i32
  }
  func.func @transform_4(%arg0: i32) -> (i32, i32) {
    %c0_i32 = arith.constant 0 : i32
    %c0_i32_0 = arith.constant 0 : i32
    %c0_i32_1 = arith.constant 0 : i32
    return %c0_i32, %c0_i32_0 : i32, i32
  }
  func.func @transform_5(%arg0: i32) -> (i32, i32) {
    %c0_i32 = arith.constant 0 : i32
    %c0_i32_0 = arith.constant 0 : i32
    return %arg0, %c0_i32 : i32, i32
  }
}

</mosaic_0001>

<llo_original>
// kernel: tpu_custom_call.1
$region0: #{tpu_custom_call.1}
  #allocation0 [shape = 'u32[]', space=smem, size = 0x4, offset = 0x4, fixed_abs, tag = 'smem constant byte address 0x4 - core index']
  #allocation1 [shape = 'u32[72,128]{1,0:T(1,128)}', space=vmem, size = 0x9000, scoped, tag = 'internal scratch']
  %s0 = inlined_call_operand.hbm [shape: f32[16,32], index: 0, kind: input, shape index: {}]
  %s1 = inlined_call_operand.hbm [shape: bf16[32,128], index: 1, kind: input, shape index: {}]
  %s2 = inlined_call_operand.vmem [shape: f32[1,128], index: 2, kind: input, shape index: {}]
  %s3 = inlined_call_operand.hbm [shape: bf16[128,128], index: 3, kind: input, shape index: {}]
  %s4 = inlined_call_operand.vmem [shape: f32[1,128], index: 4, kind: input, shape index: {}]
  %s5 = inlined_call_operand.hbm [shape: f32[16,128], index: 5, kind: output, shape index: {}]
  %s6 = sld [smem:[#allocation0]]
  $region65: #{tpu_custom_call.1} parent=0
    _
  %s8 = ssub.s32 1, %s6
  %s9 = scalar_select 0, %s8, %s6
  $region1: #{tpu_custom_call.1} parent=0
    #allocation2 [shape = 'u8[8192]{0}', space=vmem, size = 0x2000, scoped, tag = 'input window, operand 0']
    #allocation3 [shape = 's32[2]{0}', space=sflag, size = 0x8, scoped, tag = 'scoped memory for tpu_custom_call.1']
    #allocation4 [shape = 's32[2]{0}', space=sflag, size = 0x8, scoped, tag = 'scoped memory for tpu_custom_call.1']
    #allocation5 [shape = 'u8[8192]{0}', space=vmem, size = 0x2000, scoped, tag = 'input window, operand 1, single buffered']
    #allocation6 [shape = 's32[1]{0}', space=sflag, size = 0x4, scoped, tag = 'scoped memory for tpu_custom_call.1']
    #allocation7 [shape = 'u8[32768]{0}', space=vmem, size = 0x8000, scoped, tag = 'input window, operand 3, single buffered']
    #allocation8 [shape = 'u8[8192]{0}', space=vmem, size = 0x2000, scoped, tag = 'output window, operand 0']
    %10 = vsyncpa [#allocation3], 0
    %s11 = scalar_lea.sflag [#allocation3], 1
    %12 = vsyncpa %s11, 0
    %13 = vsyncpa [#allocation6], 0
    %14 = vsyncpa [#allocation4], 0
    %s15 = scalar_lea.sflag [#allocation4], 1
    %16 = vsyncpa %s15, 0
    loop: start=0, step=1, limit=4
    $region2: #{tpu_custom_call.1} parent=1 // loop_pre_header
      _
    $region3: #{tpu_custom_call.1} parent=1 // loop_header
      %s18 = sphi 0, %s22
      %p19 = scmp.ge.s32.totalorder %s18, 4
      %s28 = sphi 0, %s30
      %s31 = sphi 0, %s28
      %s32 = sphi 0, %s31
      %s48 = sphi 0, %s32
      %s52 = sphi 0, %s52
      %s54 = sphi 0, %s52
      %s55 = sphi 0, %s54
      %s69 = sphi 0, %s55
      %s73 = sphi 0, %s73
      %s75 = sphi 0, %s73
      %s76 = sphi 0, %s75
      %s90 = sphi 0, %s76
      %s94 = sphi 0, %s94
      %s96 = sphi 0, %s94
      %s97 = sphi 0, %s96
      %s111 = sphi 0, %s97
      %s115 = sphi 0, %s115
      %s117 = sphi 0, %s115
      %s118 = sphi 0, %s117
      %s132 = sphi 0, %s118
      %s138 = sphi 0, %s140
      %s141 = sphi 0, %s138
      %s142 = sphi 0, %s141
      %s158 = sphi 0, %s142
    $region4: #{tpu_custom_call.1} parent=1 // loop_header_branch
      %21 = sbr.rel (%p19) target = $region8
    $region5: #{tpu_custom_call.1} parent=1 // loop_body
      %s23 = ssub.s32 %s18, 1
      %s24 = ssub.s32 %s18, 2
      %s25 = sadd.s32 %s18, 1
      %s26 = ssub.s32 %s18, %s25
      %p27 = scmp.eq.s32.totalorder %s26, 0
      %s29 = sadd.s32 %s28, 1
      %s30 = scalar_select %p27, %s28, %s29
      %p33 = pneg %p27
      %p34 = scmp.eq.s32.totalorder %s18, 1
      %p35 = por %p33, %p34
      %p36 = scmp.ne.s32.totalorder %s28, %s31
      %p37 = scmp.eq.s32.totalorder %s18, 0
      %p38 = por %p36, %p37
      %p39 = scmp.ne.s32.totalorder %s28, %s31
      %p40 = scmp.eq.s32.totalorder %s23, 1
      %p41 = por %p39, %p40
      %p42 = scmp.ne.s32.totalorder %s31, %s32
      %p43 = scmp.eq.s32.totalorder %s23, 0
      %p44 = por %p42, %p43
      %p45 = scmp.ne.s32.totalorder %s31, %s32
      %p46 = scmp.eq.s32.totalorder %s24, 1
      %p47 = por %p45, %p46
      %p49 = scmp.ne.s32.totalorder %s32, %s48
      %p50 = scmp.eq.s32.totalorder %s24, 0
      %p51 = por %p49, %p50
      %s53 = sadd.s32 %s52, 1
      %p56 = scmp.eq.s32.totalorder %s18, 1
      %p57 = scmp.ne.s32.totalorder %s52, %s54
      %p58 = scmp.eq.s32.totalorder %s18, 0
      %p59 = por %p57, %p58
      %p60 = scmp.ne.s32.totalorder %s52, %s54
      %p61 = scmp.eq.s32.totalorder %s23, 1
      %p62 = por %p60, %p61
      %p63 = scmp.ne.s32.totalorder %s54, %s55
      %p64 = scmp.eq.s32.totalorder %s23, 0
      %p65 = por %p63, %p64
      %p66 = scmp.ne.s32.totalorder %s54, %s55
      %p67 = scmp.eq.s32.totalorder %s24, 1
      %p68 = por %p66, %p67
      %p70 = scmp.ne.s32.totalorder %s55, %s69
      %p71 = scmp.eq.s32.totalorder %s24, 0
      %p72 = por %p70, %p71
      %s74 = sadd.s32 %s73, 1
      %p77 = scmp.eq.s32.totalorder %s18, 1
      %p78 = scmp.ne.s32.totalorder %s73, %s75
      %p79 = scmp.eq.s32.totalorder %s18, 0
      %p80 = por %p78, %p79
      %p81 = scmp.ne.s32.totalorder %s73, %s75
      %p82 = scmp.eq.s32.totalorder %s23, 1
      %p83 = por %p81, %p82
      %p84 = scmp.ne.s32.totalorder %s75, %s76
      %p85 = scmp.eq.s32.totalorder %s23, 0
      %p86 = por %p84, %p85
      %p87 = scmp.ne.s32.totalorder %s75, %s76
      %p88 = scmp.eq.s32.totalorder %s24, 1
      %p89 = por %p87, %p88
      %p91 = scmp.ne.s32.totalorder %s76, %s90
      %p92 = scmp.eq.s32.totalorder %s24, 0
      %p93 = por %p91, %p92
      %s95 = sadd.s32 %s94, 1
      %p98 = scmp.eq.s32.totalorder %s18, 1
      %p99 = scmp.ne.s32.totalorder %s94, %s96
      %p100 = scmp.eq.s32.totalorder %s18, 0
      %p101 = por %p99, %p100
      %p102 = scmp.ne.s32.totalorder %s94, %s96
      %p103 = scmp.eq.s32.totalorder %s23, 1
      %p104 = por %p102, %p103
      %p105 = scmp.ne.s32.totalorder %s96, %s97
      %p106 = scmp.eq.s32.totalorder %s23, 0
      %p107 = por %p105, %p106
      %p108 = scmp.ne.s32.totalorder %s96, %s97
      %p109 = scmp.eq.s32.totalorder %s24, 1
      %p110 = por %p108, %p109
      %p112 = scmp.ne.s32.totalorder %s97, %s111
      %p113 = scmp.eq.s32.totalorder %s24, 0
      %p114 = por %p112, %p113
      %s116 = sadd.s32 %s115, 1
      %p119 = scmp.eq.s32.totalorder %s18, 1
      %p120 = scmp.ne.s32.totalorder %s115, %s117
      %p121 = scmp.eq.s32.totalorder %s18, 0
      %p122 = por %p120, %p121
      %p123 = scmp.ne.s32.totalorder %s115, %s117
      %p124 = scmp.eq.s32.totalorder %s23, 1
      %p125 = por %p123, %p124
      %p126 = scmp.ne.s32.totalorder %s117, %s118
      %p127 = scmp.eq.s32.totalorder %s23, 0
      %p128 = por %p126, %p127
      %p129 = scmp.ne.s32.totalorder %s117, %s118
      %p130 = scmp.eq.s32.totalorder %s24, 1
      %p131 = por %p129, %p130
      %p133 = scmp.ne.s32.totalorder %s118, %s132
      %p134 = scmp.eq.s32.totalorder %s24, 0
      %p135 = por %p133, %p134
      %s136 = ssub.s32 %s18, %s25
      %p137 = scmp.eq.s32.totalorder %s136, 0
      %s139 = sadd.s32 %s138, 1
      %s140 = scalar_select %p137, %s138, %s139
      %p143 = pneg %p137
      %p144 = scmp.eq.s32.totalorder %s18, 1
      %p145 = por %p143, %p144
      %p146 = scmp.ne.s32.totalorder %s138, %s141
      %p147 = scmp.eq.s32.totalorder %s18, 0
      %p148 = por %p146, %p147
      %p149 = scmp.ne.s32.totalorder %s138, %s141
      %p150 = scmp.eq.s32.totalorder %s23, 1
      %p151 = por %p149, %p150
      %p152 = scmp.ne.s32.totalorder %s141, %s142
      %p153 = scmp.eq.s32.totalorder %s23, 0
      %p154 = por %p152, %p153
      %p155 = scmp.ne.s32.totalorder %s141, %s142
      %p156 = scmp.eq.s32.totalorder %s24, 1
      %p157 = por %p155, %p156
      %p159 = scmp.ne.s32.totalorder %s142, %s158
      %p160 = scmp.eq.s32.totalorder %s24, 0
      %p161 = por %p159, %p160
      %p162 = scmp.le.s32.totalorder 1, %s18
      %p163 = scmp.lt.s32.totalorder %s18, 3
      %p164 = pnand %p162, %p163
      %p165 = pneg %p164
      // Predicated region
      $region9: #{tpu_custom_call.1} parent=5 // pred_check
        _
      $region10: #{tpu_custom_call.1} parent=5 // pred_check_branch
        %167 = sbr.rel (%p164) target = $region12
      $region11: #{tpu_custom_call.1} parent=5 // pred_region
        %s168 = ssub.s32 %s18, 1
        // Predicated region
        $region13: #{tpu_custom_call.1} parent=11 // pred_check
          %p169 = pneg %p65
        $region14: #{tpu_custom_call.1} parent=11 // pred_check_branch
          %171 = sbr.rel (%p169) target = $region16
        $region15: #{tpu_custom_call.1} parent=11 // pred_region
          %173 = vsyncadd [#allocation6], 0
          %s174 = sshll.u32 %s1, 4
          %s175 = int_to_ptr.hbm [resolvable:$true] %s174
          %s176 = sshll.u32 [#allocation5], 4
          %s177 = int_to_ptr.vmem [resolvable:$true] %s176
          %182 = dma.hbm_to_vmem [thread:$0]  %s175, 256, %s177, [#allocation6], 64, 64, 4
        $region16: #{tpu_custom_call.1} parent=11 // pred_fallthru
          _
        // Predicated region
        $region17: #{tpu_custom_call.1} parent=11 // pred_check
          %p183 = pneg %p86
        $region18: #{tpu_custom_call.1} parent=11 // pred_check_branch
          %185 = sbr.rel (%p183) target = $region20
        $region19: #{tpu_custom_call.1} parent=11 // pred_region
          _
        $region20: #{tpu_custom_call.1} parent=11 // pred_fallthru
          _
        // Predicated region
        $region21: #{tpu_custom_call.1} parent=11 // pred_check
          %p186 = pneg %p107
        $region22: #{tpu_custom_call.1} parent=11 // pred_check_branch
          %188 = sbr.rel (%p186) target = $region24
        $region23: #{tpu_custom_call.1} parent=11 // pred_region
          %190 = vsyncadd [#allocation6], 0
          %s191 = sshll.u32 %s3, 4
          %s192 = int_to_ptr.hbm [resolvable:$true] %s191
          %s193 = sshll.u32 [#allocation7], 4
          %s194 = int_to_ptr.vmem [resolvable:$true] %s193
          %199 = dma.hbm_to_vmem [thread:$0]  %s192, 1024, %s194, [#allocation6], 64, 64, 4
        $region24: #{tpu_custom_call.1} parent=11 // pred_fallthru
          _
        // Predicated region
        $region25: #{tpu_custom_call.1} parent=11 // pred_check
          %p200 = pneg %p128
        $region26: #{tpu_custom_call.1} parent=11 // pred_check_branch
          %202 = sbr.rel (%p200) target = $region28
        $region27: #{tpu_custom_call.1} parent=11 // pred_region
          _
        $region28: #{tpu_custom_call.1} parent=11 // pred_fallthru
          _
      $region12: #{tpu_custom_call.1} parent=5 // pred_fallthru
        _
      %p203 = scmp.lt.s32.totalorder %s18, 2
      // Predicated region
      $region29: #{tpu_custom_call.1} parent=5 // pred_check
        %p204 = pneg %p203
      $region30: #{tpu_custom_call.1} parent=5 // pred_check_branch
        %206 = sbr.rel (%p204) target = $region32
      $region31: #{tpu_custom_call.1} parent=5 // pred_region
        // Predicated region
        $region33: #{tpu_custom_call.1} parent=31 // pred_check
          %p207 = pneg %p38
        $region34: #{tpu_custom_call.1} parent=31 // pred_check_branch
          %209 = sbr.rel (%p207) target = $region36
        $region35: #{tpu_custom_call.1} parent=31 // pred_region
          %s210 = sand.u32 %s28, 1
          %s211 = scalar_lea.sflag [#allocation3], %s210
          %s212 = sand.u32 %s28, 1
          %s213 = smul.addr %s212, 8
          %s214 = scalar_lea.vmem [#allocation2], %s213
          %216 = vsyncadd %s211, 0
          %s217 = smul.addr %s18, 8
          %s218 = scalar_lea.hbm %s0, %s217
          %s220 = sshll.u32 %s218, 4
          %s221 = int_to_ptr.hbm [resolvable:$true] %s220
          %s222 = sshll.u32 %s214, 4
          %s223 = int_to_ptr.vmem [resolvable:$true] %s222
          %225 = dma.hbm_to_vmem [thread:$0]  %s221, 128, %s223, %s211
        $region36: #{tpu_custom_call.1} parent=31 // pred_fallthru
          _
      $region32: #{tpu_custom_call.1} parent=5 // pred_fallthru
        _
      %p226 = scmp.le.s32.totalorder 1, %s18
      %p227 = scmp.lt.s32.totalorder %s18, 3
      %p228 = pnand %p226, %p227
      %p229 = pneg %p228
      // Predicated region
      $region37: #{tpu_custom_call.1} parent=5 // pred_check
        _
      $region38: #{tpu_custom_call.1} parent=5 // pred_check_branch
        %231 = sbr.rel (%p228) target = $region40
      $region39: #{tpu_custom_call.1} parent=5 // pred_region
        %s232 = ssub.s32 %s18, 1
        %s233 = sand.u32 %s31, 1
        %s234 = scalar_lea.sflag [#allocation3], %s233
        %s235 = sand.u32 %s31, 1
        %s236 = smul.addr %s235, 8
        %s237 = scalar_lea.vmem [#allocation2], %s236
        // Predicated region
        $region41: #{tpu_custom_call.1} parent=39 // pred_check
          %p238 = pneg %p44
        $region42: #{tpu_custom_call.1} parent=39 // pred_check_branch
          %240 = sbr.rel (%p238) target = $region44
        $region43: #{tpu_custom_call.1} parent=39 // pred_region
          %242 = dma.done %s234, 128
        $region44: #{tpu_custom_call.1} parent=39 // pred_fallthru
          _
        // Predicated region
        $region45: #{tpu_custom_call.1} parent=39 // pred_check
          %p243 = pneg %p65
        $region46: #{tpu_custom_call.1} parent=39 // pred_check_branch
          %245 = sbr.rel (%p243) target = $region48
        $region47: #{tpu_custom_call.1} parent=39 // pred_region
          %247 = dma.done [#allocation6], 256
        $region48: #{tpu_custom_call.1} parent=39 // pred_fallthru
          _
        // Predicated region
        $region49: #{tpu_custom_call.1} parent=39 // pred_check
          %p248 = pneg %p107
        $region50: #{tpu_custom_call.1} parent=39 // pred_check_branch
          %250 = sbr.rel (%p248) target = $region52
        $region51: #{tpu_custom_call.1} parent=39 // pred_region
          %252 = dma.done [#allocation6], 1024
        $region52: #{tpu_custom_call.1} parent=39 // pred_fallthru
          _
        %s253 = sand.u32 %s31, 1
        %s254 = scalar_lea.sflag [#allocation3], %s253
        %s255 = sand.u32 %s31, 1
        %s256 = smul.addr %s255, 8
        %s257 = scalar_lea.vmem [#allocation2], %s256
        %p258 = pneg %p44
        %p259 = pneg %p41
        %p260 = pneg %p65
        %p261 = pneg %p62
        %p262 = pneg %p86
        %p263 = pneg %p83
        %p264 = pneg %p107
        %p265 = pneg %p104
        %p266 = pneg %p128
        %p267 = pneg %p125
        %p268 = pneg %p154
        %p269 = pneg %p151
        %s270 = sand.u32 %s141, 1
        %s271 = scalar_lea.sflag [#allocation4], %s270
        %s272 = sand.u32 %s141, 1
        %s273 = smul.addr %s272, 8
        %s274 = scalar_lea.vmem [#allocation8], %s273
        %v276 = vld [vmem:[%s237] sm:$0xff]
        %v277 = vpack.c.bf16 %v276, %v276
        %v278 = vld [vmem:[#allocation5] sm:$0xf]
        %v279 = vld [vmem:[#allocation5 + $0x4] sm:$0xf]
        %v280 = vld [vmem:[#allocation5 + $0x8] sm:$0xf]
        %v281 = vld [vmem:[#allocation5 + $0xc] sm:$0xf]
        %v282 = vld [vmem:[%s2] sm:$0x1]
        %v284 = vperm.slane %v282, 0
        %v290 = vunpack.c.l.b16 %v278
        %v291 = vunpack.c.l.b16 %v279
        %v292 = vunpack.c.l.b16 %v280
        %v293 = vunpack.c.l.b16 %v281
        %v294 = vpack.c.b16 %v291, %v290
        %v295 = vpack.c.b16 %v293, %v292
        %vm298 = vcmask 261120
        %v300 = vsel %vm298, %v277, 0
        %302 = vmatpush.bf16.msra.mxu0 0
        %303 = vmatpush.bf16.msra.mxu0 0
        %304 = vmatpush.bf16.msra.mxu0 0
        %305 = vmatpush.bf16.msra.mxu0 0
        %306 = vmatpush.bf16.msra.mxu0 0
        %307 = vmatpush.bf16.msra.mxu0 0
        %308 = vmatpush.bf16.msra.mxu0 %v295
        %309 = vmatpush.bf16.msra.mxu0 %v294
        %310 = vmatmul.bf16.gmra.mxu0 %v300
        %v311 = vpop.f32.mrf.mxu0
        %v312 = vadd.f32 %v284, %v311
        %v313 = vpop.f32.mrf.mxu0
        %314 = vdwg.mxu0
        %vm315 = vcmp.gt.f32.partialorder %v312, 0.0
        %v316 = vmul.f32 %v312, 0.01
        %v317 = vsel %vm315, %v312, %v316
        %v318 = vpack.c.bf16 %v317, %v317
        %v319 = vld [vmem:[#allocation7] sm:$0xf]
        %v320 = vld [vmem:[#allocation7 + $0x4] sm:$0xf]
        %v321 = vld [vmem:[#allocation7 + $0x8] sm:$0xf]
        %v322 = vld [vmem:[#allocation7 + $0xc] sm:$0xf]
        %v323 = vld [vmem:[#allocation7 + $0x10] sm:$0xf]
        %v324 = vld [vmem:[#allocation7 + $0x14] sm:$0xf]
        %v325 = vld [vmem:[#allocation7 + $0x18] sm:$0xf]
        %v326 = vld [vmem:[#allocation7 + $0x1c] sm:$0xf]
        %v327 = vld [vmem:[#allocation7 + $0x20] sm:$0xf]
        %v328 = vld [vmem:[#allocation7 + $0x24] sm:$0xf]
        %v329 = vld [vmem:[#allocation7 + $0x28] sm:$0xf]
        %v330 = vld [vmem:[#allocation7 + $0x2c] sm:$0xf]
        %v331 = vld [vmem:[#allocation7 + $0x30] sm:$0xf]
        %v332 = vld [vmem:[#allocation7 + $0x34] sm:$0xf]
        %v333 = vld [vmem:[#allocation7 + $0x38] sm:$0xf]
        %v334 = vld [vmem:[#allocation7 + $0x3c] sm:$0xf]
        %v335 = vld [vmem:[%s4] sm:$0x1]
        %v337 = vperm.slane %v335, 0
        %v355 = vunpack.c.l.b16 %v319
        %v356 = vunpack.c.l.b16 %v320
        %v357 = vunpack.c.l.b16 %v321
        %v358 = vunpack.c.l.b16 %v322
        %v359 = vunpack.c.l.b16 %v323
        %v360 = vunpack.c.l.b16 %v324
        %v361 = vunpack.c.l.b16 %v325
        %v362 = vunpack.c.l.b16 %v326
        %v363 = vunpack.c.l.b16 %v327
        %v364 = vunpack.c.l.b16 %v328
        %v365 = vunpack.c.l.b16 %v329
        %v366 = vunpack.c.l.b16 %v330
        %v367 = vunpack.c.l.b16 %v331
        %v368 = vunpack.c.l.b16 %v332
        %v369 = vunpack.c.l.b16 %v333
        %v370 = vunpack.c.l.b16 %v334
        %v371 = vpack.c.b16 %v356, %v355
        %v372 = vpack.c.b16 %v358, %v357
        %v373 = vpack.c.b16 %v360, %v359
        %v374 = vpack.c.b16 %v362, %v361
        %v375 = vpack.c.b16 %v364, %v363
        %v376 = vpack.c.b16 %v366, %v365
        %v377 = vpack.c.b16 %v368, %v367
        %v378 = vpack.c.b16 %v370, %v369
        %387 = vmatpush.bf16.msra.mxu0 %v378
        %388 = vmatpush.bf16.msra.mxu0 %v377
        %389 = vmatpush.bf16.msra.mxu0 %v376
        %390 = vmatpush.bf16.msra.mxu0 %v375
        %391 = vmatpush.bf16.msra.mxu0 %v374
        %392 = vmatpush.bf16.msra.mxu0 %v373
        %393 = vmatpush.bf16.msra.mxu0 %v372
        %394 = vmatpush.bf16.msra.mxu0 %v371
        %395 = vmatmul.bf16.gmra.mxu0 %v318
        %v396 = vpop.f32.mrf.mxu0
        %v397 = vadd.f32 %v337, %v396
        %v398 = vpop.f32.mrf.mxu0
        %399 = vdwg.mxu0
        %v400 = vlaneseq
        %v401 = vand.u32 %v400, 127
        %v402 = vlaneseq
        %v403 = vshrl.u32 %v402, 7
        %v404 = vadd.s32 %v403, 8
        %v405 = vadd.s32 %v403, 16
        %v406 = vadd.s32 %v403, 24
        %v407 = vadd.s32 %v403, 32
        %v408 = vadd.s32 %v403, 40
        %v409 = vadd.s32 %v403, 48
        %v410 = vadd.s32 %v403, 56
        %v411 = vadd.s32 %v403, 64
        %v412 = vadd.s32 %v403, 72
        %v413 = vadd.s32 %v403, 80
        %v414 = vadd.s32 %v403, 88
        %v415 = vadd.s32 %v403, 96
        %v416 = vadd.s32 %v403, 104
        %v417 = vadd.s32 %v403, 112
        %v418 = vadd.s32 %v403, 120
        %v419 = vmul.u32 %v401, 6
        %v420 = vadd.s32 %v419, 18
        %vm421 = vcmp.ge.s32.totalorder %v403, %v420
        %vm422 = vcmp.ge.s32.totalorder %v404, %v420
        %vm423 = vcmp.ge.s32.totalorder %v405, %v420
        %vm424 = vcmp.ge.s32.totalorder %v406, %v420
        %vm425 = vcmp.ge.s32.totalorder %v407, %v420
        %vm426 = vcmp.ge.s32.totalorder %v408, %v420
        %vm427 = vcmp.ge.s32.totalorder %v409, %v420
        %vm428 = vcmp.ge.s32.totalorder %v410, %v420
        %vm429 = vcmp.ge.s32.totalorder %v411, %v420
        %vm430 = vcmp.ge.s32.totalorder %v412, %v420
        %vm431 = vcmp.ge.s32.totalorder %v413, %v420
        %vm432 = vcmp.ge.s32.totalorder %v414, %v420
        %vm433 = vcmp.ge.s32.totalorder %v415, %v420
        %vm434 = vcmp.ge.s32.totalorder %v416, %v420
        %vm435 = vcmp.ge.s32.totalorder %v417, %v420
        %vm436 = vcmp.ge.s32.totalorder %v418, %v420
        %v437 = vadd.s32 %v420, 6
        %vm438 = vcmp.lt.s32.totalorder %v403, %v437
        %vm439 = vcmp.lt.s32.totalorder %v404, %v437
        %vm440 = vcmp.lt.s32.totalorder %v405, %v437
        %vm441 = vcmp.lt.s32.totalorder %v406, %v437
        %vm442 = vcmp.lt.s32.totalorder %v407, %v437
        %vm443 = vcmp.lt.s32.totalorder %v408, %v437
        %vm444 = vcmp.lt.s32.totalorder %v409, %v437
        %vm445 = vcmp.lt.s32.totalorder %v410, %v437
        %vm446 = vcmp.lt.s32.totalorder %v411, %v437
        %vm447 = vcmp.lt.s32.totalorder %v412, %v437
        %vm448 = vcmp.lt.s32.totalorder %v413, %v437
        %vm449 = vcmp.lt.s32.totalorder %v414, %v437
        %vm450 = vcmp.lt.s32.totalorder %v415, %v437
        %vm451 = vcmp.lt.s32.totalorder %v416, %v437
        %vm452 = vcmp.lt.s32.totalorder %v417, %v437
        %vm453 = vcmp.lt.s32.totalorder %v418, %v437
        %vm454 = vmand %vm421, %vm438
        %vm455 = vmand %vm422, %vm439
        %vm456 = vmand %vm423, %vm440
        %vm457 = vmand %vm424, %vm441
        %vm458 = vmand %vm425, %vm442
        %vm459 = vmand %vm426, %vm443
        %vm460 = vmand %vm427, %vm444
        %vm461 = vmand %vm428, %vm445
        %vm462 = vmand %vm429, %vm446
        %vm463 = vmand %vm430, %vm447
        %vm464 = vmand %vm431, %vm448
        %vm465 = vmand %vm432, %vm449
        %vm466 = vmand %vm433, %vm450
        %vm467 = vmand %vm434, %vm451
        %vm468 = vmand %vm435, %vm452
        %vm469 = vmand %vm436, %vm453
        %vm470 = vcmp.lt.s32.totalorder %v401, 3
        %vm471 = vmand %vm454, %vm470
        %vm472 = vmand %vm455, %vm470
        %vm473 = vmand %vm456, %vm470
        %vm474 = vmand %vm457, %vm470
        %vm475 = vmand %vm458, %vm470
        %vm476 = vmand %vm459, %vm470
        %vm477 = vmand %vm460, %vm470
        %vm478 = vmand %vm461, %vm470
        %vm479 = vmand %vm462, %vm470
        %vm480 = vmand %vm463, %vm470
        %vm481 = vmand %vm464, %vm470
        %vm482 = vmand %vm465, %vm470
        %vm483 = vmand %vm466, %vm470
        %vm484 = vmand %vm467, %vm470
        %vm485 = vmand %vm468, %vm470
        %vm486 = vmand %vm469, %vm470
        %v487 = vsel %vm471, 1, 0
        %v488 = vsel %vm472, 1, 0
        %v489 = vsel %vm473, 1, 0
        %v490 = vsel %vm474, 1, 0
        %v491 = vsel %vm475, 1, 0
        %v492 = vsel %vm476, 1, 0
        %v493 = vsel %vm477, 1, 0
        %v494 = vsel %vm478, 1, 0
        %v495 = vsel %vm479, 1, 0
        %v496 = vsel %vm480, 1, 0
        %v497 = vsel %vm481, 1, 0
        %v498 = vsel %vm482, 1, 0
        %v499 = vsel %vm483, 1, 0
        %v500 = vsel %vm484, 1, 0
        %v501 = vsel %vm485, 1, 0
        %v502 = vsel %vm486, 1, 0
        %v503 = vcvt.s32.f32 %v487
        %v504 = vcvt.s32.f32 %v488
        %v505 = vcvt.s32.f32 %v489
        %v506 = vcvt.s32.f32 %v490
        %v507 = vcvt.s32.f32 %v491
        %v508 = vcvt.s32.f32 %v492
        %v509 = vcvt.s32.f32 %v493
        %v510 = vcvt.s32.f32 %v494
        %v511 = vcvt.s32.f32 %v495
        %v512 = vcvt.s32.f32 %v496
        %v513 = vcvt.s32.f32 %v497
        %v514 = vcvt.s32.f32 %v498
        %v515 = vcvt.s32.f32 %v499
        %v516 = vcvt.s32.f32 %v500
        %v517 = vcvt.s32.f32 %v501
        %v518 = vcvt.s32.f32 %v502
        %v519 = vmul.u32 %v403, 6
        %v520 = vadd.s32 %v519, 18
        %vm521 = vcmp.ge.s32.totalorder %v401, %v520
        %v522 = vadd.s32 %v520, 6
        %vm523 = vcmp.lt.s32.totalorder %v401, %v522
        %vm524 = vmand %vm521, %vm523
        %vm525 = vcmp.lt.s32.totalorder %v403, 3
        %vm526 = vmand %vm524, %vm525
        %v527 = vsel %vm526, 1, 0
        %v528 = vcvt.s32.f32 %v527
        %vm529 = vcmp.ge.s32.totalorder %v401, 18
        %vm530 = vcmp.lt.s32.totalorder %v401, 24
        %vm531 = vmand %vm529, %vm530
        %v532 = vsel %vm531, %v397, -3e+38
        %533 = vmax.xlane.f32.xlu0 %v532
        %v534 = vpop.xlane.xlu0 %533
        %v535 = vsel %vm531, %v534, 0.0
        %vm536 = vcmp.ge.s32.totalorder %v401, 24
        %vm537 = vcmp.lt.s32.totalorder %v401, 30
        %vm538 = vmand %vm536, %vm537
        %v539 = vsel %vm538, %v397, -3e+38
        %540 = vmax.xlane.f32.xlu0 %v539
        %v541 = vpop.xlane.xlu0 %540
        %v542 = vsel %vm538, %v541, %v535
        %vm543 = vcmp.ge.s32.totalorder %v401, 30
        %vm544 = vcmp.lt.s32.totalorder %v401, 36
        %vm545 = vmand %vm543, %vm544
        %v546 = vsel %vm545, %v397, -3e+38
        %547 = vmax.xlane.f32.xlu0 %v546
        %v548 = vpop.xlane.xlu0 %547
        %v549 = vsel %vm545, %v548, %v542
        %v550 = vsub.f32 %v397, %v549
        %v551 = vmul.f32 %v550, 1.442695
        %v552 = vpow.pop %v551
        %v553 = vsel %vm529, %v552, 0.0
        %554 = vmatpush.msra.mxu0 %v518
        %555 = vmatpush.msra.mxu0 %v517
        %556 = vmatpush.msra.mxu0 %v516
        %557 = vmatpush.msra.mxu0 %v515
        %558 = vmatpush.msra.mxu0 %v514
        %559 = vmatpush.msra.mxu0 %v513
        %560 = vmatpush.msra.mxu0 %v512
        %561 = vmatpush.msra.mxu0 %v511
        %562 = vmatpush.msra.mxu0 %v510
        %563 = vmatpush.msra.mxu0 %v509
        %564 = vmatpush.msra.mxu0 %v508
        %565 = vmatpush.msra.mxu0 %v507
        %566 = vmatpush.msra.mxu0 %v506
        %567 = vmatpush.msra.mxu0 %v505
        %568 = vmatpush.msra.mxu0 %v504
        %569 = vmatpush.msra.mxu0 %v503
        %570 = vmatmul.f32.gmra.mxu0 %v553
        %v571 = vpop.f32.mrf.mxu0
        %v572 = vadd.f32 0.0, %v571
        %573 = vdwg.mxu0
        %v574 = vmax.f32 %v572, 1e-30
        %v575 = vlog2.pop %v574
        %v576 = vmul.f32 %v575, 0.6931472
        %vm577 = vcmask 64512
        %v579 = vsel %vm577, %v576, 0
        %581 = vmatpush.msra.mxu0 0.0
        %582 = vmatpush.msra.mxu0 0.0
        %583 = vmatpush.msra.mxu0 0.0
        %584 = vmatpush.msra.mxu0 0.0
        %585 = vmatpush.msra.mxu0 0.0
        %586 = vmatpush.msra.mxu0 0.0
        %587 = vmatpush.msra.mxu0 0.0
        %588 = vmatpush.msra.mxu0 0.0
        %589 = vmatpush.msra.mxu0 0.0
        %590 = vmatpush.msra.mxu0 0.0
        %591 = vmatpush.msra.mxu0 0.0
        %592 = vmatpush.msra.mxu0 0.0
        %593 = vmatpush.msra.mxu0 0.0
        %594 = vmatpush.msra.mxu0 0.0
        %595 = vmatpush.msra.mxu0 0.0
        %596 = vmatpush.msra.mxu0 %v528
        %597 = vmatmul.f32.gmra.mxu0 %v579
        %v598 = vpop.f32.mrf.mxu0
        %v599 = vadd.f32 0.0, %v598
        %600 = vdwg.mxu0
        %v601 = vsub.f32 %v550, %v599
        %602 = vst [vmem:[%s274] sm:$0xff] %v601
        %s603 = sand.u32 %s141, 1
        %s604 = scalar_lea.sflag [#allocation4], %s603
        %s605 = sand.u32 %s141, 1
        %s606 = smul.addr %s605, 8
        %s607 = scalar_lea.vmem [#allocation8], %s606
        // Predicated region
        $region53: #{tpu_custom_call.1} parent=39 // pred_check
          %p608 = pneg %p151
        $region54: #{tpu_custom_call.1} parent=39 // pred_check_branch
          %610 = sbr.rel (%p608) target = $region56
        $region55: #{tpu_custom_call.1} parent=39 // pred_region
          %612 = vsyncadd %s604, 0
          %s613 = smul.addr %s23, 8
          %s614 = scalar_lea.hbm %s5, %s613
          %s616 = sshll.u32 %s607, 4
          %s617 = int_to_ptr.vmem [resolvable:$true] %s616
          %s618 = sshll.u32 %s614, 4
          %s619 = int_to_ptr.hbm [resolvable:$true] %s618
          %621 = dma.vmem_to_hbm [thread:$0]  %s617, 128, %s619, %s604
        $region56: #{tpu_custom_call.1} parent=39 // pred_fallthru
          _
      $region40: #{tpu_custom_call.1} parent=5 // pred_fallthru
        _
      %p622 = scmp.le.s32.totalorder 2, %s18
      // Predicated region
      $region57: #{tpu_custom_call.1} parent=5 // pred_check
        %p623 = pneg %p622
      $region58: #{tpu_custom_call.1} parent=5 // pred_check_branch
        %625 = sbr.rel (%p623) target = $region60
      $region59: #{tpu_custom_call.1} parent=5 // pred_region
        %s626 = ssub.s32 %s18, 2
        // Predicated region
        $region61: #{tpu_custom_call.1} parent=59 // pred_check
          %p627 = pneg %p157
        $region62: #{tpu_custom_call.1} parent=59 // pred_check_branch
          %629 = sbr.rel (%p627) target = $region64
        $region63: #{tpu_custom_call.1} parent=59 // pred_region
          %s630 = sand.u32 %s142, 1
          %s631 = scalar_lea.sflag [#allocation4], %s630
          %s632 = sand.u32 %s142, 1
          %s633 = smul.addr %s632, 8
          %s634 = scalar_lea.vmem [#allocation8], %s633
          %636 = dma.done %s631, 128
        $region64: #{tpu_custom_call.1} parent=59 // pred_fallthru
          _
      $region60: #{tpu_custom_call.1} parent=5 // pred_fallthru
        _
    $region6: #{tpu_custom_call.1} parent=1 // loop_footer
      %s22 = sadd.s32 1, %s18
    $region7: #{tpu_custom_call.1} parent=1 // loop_footer_branch
      %17 = sbr.rel target = $region3
    $region8: #{tpu_custom_call.1} parent=1 // loop_exit
      _
    %637 = vsyncpa [#allocation3], 1
    %s638 = scalar_lea.sflag [#allocation3], 1
    %639 = vsyncpa %s638, 1
    %640 = vsyncpa [#allocation6], 1
    %641 = vsyncpa [#allocation4], 1
    %s642 = scalar_lea.sflag [#allocation4], 1
    %643 = vsyncpa %s642, 1

// kernel: tpu_custom_call.1
$region0: #{tpu_custom_call.1}
  #allocation0 [shape = 'u32[]', space=smem, size = 0x4, offset = 0x4, fixed_abs, tag = 'smem constant byte address 0x4 - core index']
  #allocation1 [shape = 'u32[72,128]{1,0:T(1,128)}', space=vmem, size = 0x9000, scoped, tag = 'internal scratch']
  %s0 = inlined_call_operand.hbm [shape: f32[16,32], index: 0, kind: input, shape index: {}]
  %s1 = inlined_call_operand.hbm [shape: bf16[32,128], index: 1, kind: input, shape index: {}]
  %s2 = inlined_call_operand.vmem [shape: f32[1,128], index: 2, kind: input, shape index: {}]
  %s3 = inlined_call_operand.hbm [shape: bf16[128,128], index: 3, kind: input, shape index: {}]
  %s4 = inlined_call_operand.vmem [shape: f32[1,128], index: 4, kind: input, shape index: {}]
  %s5 = inlined_call_operand.hbm [shape: f32[16,128], index: 5, kind: output, shape index: {}]
  %s6 = sld [smem:[#allocation0]]
  $region65: #{tpu_custom_call.1} parent=0
    _
  %s8 = ssub.s32 1, %s6
  %s9 = scalar_select 0, %s8, %s6
  $region1: #{tpu_custom_call.1} parent=0
    #allocation2 [shape = 'u8[8192]{0}', space=vmem, size = 0x2000, scoped, tag = 'input window, operand 0']
    #allocation3 [shape = 's32[2]{0}', space=sflag, size = 0x8, scoped, tag = 'scoped memory for tpu_custom_call.1']
    #allocation4 [shape = 's32[2]{0}', space=sflag, size = 0x8, scoped, tag = 'scoped memory for tpu_custom_call.1']
    #allocation5 [shape = 'u8[8192]{0}', space=vmem, size = 0x2000, scoped, tag = 'input window, operand 1, single buffered']
    #allocation6 [shape = 's32[1]{0}', space=sflag, size = 0x4, scoped, tag = 'scoped memory for tpu_custom_call.1']
    #allocation7 [shape = 'u8[32768]{0}', space=vmem, size = 0x8000, scoped, tag = 'input window, operand 3, single buffered']
    #allocation8 [shape = 'u8[8192]{0}', space=vmem, size = 0x2000, scoped, tag = 'output window, operand 0']
    %10 = vsyncpa [#allocation3], 0
    %s11 = scalar_lea.sflag [#allocation3], 1
    %12 = vsyncpa %s11, 0
    %13 = vsyncpa [#allocation6], 0
    %14 = vsyncpa [#allocation4], 0
    %s15 = scalar_lea.sflag [#allocation4], 1
    %16 = vsyncpa %s15, 0
    loop: start=0, step=1, limit=4
    $region2: #{tpu_custom_call.1} parent=1 // loop_pre_header
      _
    $region3: #{tpu_custom_call.1} parent=1 // loop_header
      %s18 = sphi 0, %s22
      %p19 = scmp.ge.s32.totalorder %s18, 4
      %s28 = sphi 0, %s30
      %s31 = sphi 0, %s28
      %s32 = sphi 0, %s31
      %s48 = sphi 0, %s32
      %s52 = sphi 0, %s52
      %s54 = sphi 0, %s52
      %s55 = sphi 0, %s54
      %s69 = sphi 0, %s55
      %s73 = sphi 0, %s73
      %s75 = sphi 0, %s73
      %s76 = sphi 0, %s75
      %s90 = sphi 0, %s76
      %s94 = sphi 0, %s94
      %s96 = sphi 0, %s94
      %s97 = sphi 0, %s96
      %s111 = sphi 0, %s97
      %s115 = sphi 0, %s115
      %s117 = sphi 0, %s115
      %s118 = sphi 0, %s117
      %s132 = sphi 0, %s118
      %s138 = sphi 0, %s140
      %s141 = sphi 0, %s138
      %s142 = sphi 0, %s141
      %s158 = sphi 0, %s142
    $region4: #{tpu_custom_call.1} parent=1 // loop_header_branch
      %21 = sbr.rel (%p19) target = $region8
    $region5: #{tpu_custom_call.1} parent=1 // loop_body
      %s23 = ssub.s32 %s18, 1
      %s24 = ssub.s32 %s18, 2
      %s25 = sadd.s32 %s18, 1
      %s26 = ssub.s32 %s18, %s25
      %p27 = scmp.eq.s32.totalorder %s26, 0
      %s29 = sadd.s32 %s28, 1
      %s30 = scalar_select %p27, %s28, %s29
      %p33 = pneg %p27
      %p34 = scmp.eq.s32.totalorder %s18, 1
      %p35 = por %p33, %p34
      %p36 = scmp.ne.s32.totalorder %s28, %s31
      %p37 = scmp.eq.s32.totalorder %s18, 0
      %p38 = por %p36, %p37
      %p39 = scmp.ne.s32.totalorder %s28, %s31
      %p40 = scmp.eq.s32.totalorder %s23, 1
      %p41 = por %p39, %p40
      %p42 = scmp.ne.s32.totalorder %s31, %s32
      %p43 = scmp.eq.s32.totalorder %s23, 0
      %p44 = por %p42, %p43
      %p45 = scmp.ne.s32.totalorder %s31, %s32
      %p46 = scmp.eq.s32.totalorder %s24, 1
      %p47 = por %p45, %p46
      %p49 = scmp.ne.s32.totalorder %s32, %s48
      %p50 = scmp.eq.s32.totalorder %s24, 0
      %p51 = por %p49, %p50
      %s53 = sadd.s32 %s52, 1
      %p56 = scmp.eq.s32.totalorder %s18, 1
      %p57 = scmp.ne.s32.totalorder %s52, %s54
      %p58 = scmp.eq.s32.totalorder %s18, 0
      %p59 = por %p57, %p58
      %p60 = scmp.ne.s32.totalorder %s52, %s54
      %p61 = scmp.eq.s32.totalorder %s23, 1
      %p62 = por %p60, %p61
      %p63 = scmp.ne.s32.totalorder %s54, %s55
      %p64 = scmp.eq.s32.totalorder %s23, 0
      %p65 = por %p63, %p64
      %p66 = scmp.ne.s32.totalorder %s54, %s55
      %p67 = scmp.eq.s32.totalorder %s24, 1
      %p68 = por %p66, %p67
      %p70 = scmp.ne.s32.totalorder %s55, %s69
      %p71 = scmp.eq.s32.totalorder %s24, 0
      %p72 = por %p70, %p71
      %s74 = sadd.s32 %s73, 1
      %p77 = scmp.eq.s32.totalorder %s18, 1
      %p78 = scmp.ne.s32.totalorder %s73, %s75
      %p79 = scmp.eq.s32.totalorder %s18, 0
      %p80 = por %p78, %p79
      %p81 = scmp.ne.s32.totalorder %s73, %s75
      %p82 = scmp.eq.s32.totalorder %s23, 1
      %p83 = por %p81, %p82
      %p84 = scmp.ne.s32.totalorder %s75, %s76
      %p85 = scmp.eq.s32.totalorder %s23, 0
      %p86 = por %p84, %p85
      %p87 = scmp.ne.s32.totalorder %s75, %s76
      %p88 = scmp.eq.s32.totalorder %s24, 1
      %p89 = por %p87, %p88
      %p91 = scmp.ne.s32.totalorder %s76, %s90
      %p92 = scmp.eq.s32.totalorder %s24, 0
      %p93 = por %p91, %p92
      %s95 = sadd.s32 %s94, 1
      %p98 = scmp.eq.s32.totalorder %s18, 1
      %p99 = scmp.ne.s32.totalorder %s94, %s96
      %p100 = scmp.eq.s32.totalorder %s18, 0
      %p101 = por %p99, %p100
      %p102 = scmp.ne.s32.totalorder %s94, %s96
      %p103 = scmp.eq.s32.totalorder %s23, 1
      %p104 = por %p102, %p103
      %p105 = scmp.ne.s32.totalorder %s96, %s97
      %p106 = scmp.eq.s32.totalorder %s23, 0
      %p107 = por %p105, %p106
      %p108 = scmp.ne.s32.totalorder %s96, %s97
      %p109 = scmp.eq.s32.totalorder %s24, 1
      %p110 = por %p108, %p109
      %p112 = scmp.ne.s32.totalorder %s97, %s111
      %p113 = scmp.eq.s32.totalorder %s24, 0
      %p114 = por %p112, %p113
      %s116 = sadd.s32 %s115, 1
      %p119 = scmp.eq.s32.totalorder %s18, 1
      %p120 = scmp.ne.s32.totalorder %s115, %s117
      %p121 = scmp.eq.s32.totalorder %s18, 0
      %p122 = por %p120, %p121
      %p123 = scmp.ne.s32.totalorder %s115, %s117
      %p124 = scmp.eq.s32.totalorder %s23, 1
      %p125 = por %p123, %p124
      %p126 = scmp.ne.s32.totalorder %s117, %s118
      %p127 = scmp.eq.s32.totalorder %s23, 0
      %p128 = por %p126, %p127
      %p129 = scmp.ne.s32.totalorder %s117, %s118
      %p130 = scmp.eq.s32.totalorder %s24, 1
      %p131 = por %p129, %p130
      %p133 = scmp.ne.s32.totalorder %s118, %s132
      %p134 = scmp.eq.s32.totalorder %s24, 0
      %p135 = por %p133, %p134
      %s136 = ssub.s32 %s18, %s25
      %p137 = scmp.eq.s32.totalorder %s136, 0
      %s139 = sadd.s32 %s138, 1
      %s140 = scalar_select %p137, %s138, %s139
      %p143 = pneg %p137
      %p144 = scmp.eq.s32.totalorder %s18, 1
      %p145 = por %p143, %p144
      %p146 = scmp.ne.s32.totalorder %s138, %s141
      %p147 = scmp.eq.s32.totalorder %s18, 0
      %p148 = por %p146, %p147
      %p149 = scmp.ne.s32.totalorder %s138, %s141
      %p150 = scmp.eq.s32.totalorder %s23, 1
      %p151 = por %p149, %p150
      %p152 = scmp.ne.s32.totalorder %s141, %s142
      %p153 = scmp.eq.s32.totalorder %s23, 0
      %p154 = por %p152, %p153
      %p155 = scmp.ne.s32.totalorder %s141, %s142
      %p156 = scmp.eq.s32.totalorder %s24, 1
      %p157 = por %p155, %p156
      %p159 = scmp.ne.s32.totalorder %s142, %s158
      %p160 = scmp.eq.s32.totalorder %s24, 0
      %p161 = por %p159, %p160
      %p162 = scmp.le.s32.totalorder 1, %s18
      %p163 = scmp.lt.s32.totalorder %s18, 3
      %p164 = pnand %p162, %p163
      %p165 = pneg %p164
      // Predicated region
      $region9: #{tpu_custom_call.1} parent=5 // pred_check
        _
      $region10: #{tpu_custom_call.1} parent=5 // pred_check_branch
        %167 = sbr.rel (%p164) target = $region12
      $region11: #{tpu_custom_call.1} parent=5 // pred_region
        %s168 = ssub.s32 %s18, 1
        // Predicated region
        $region13: #{tpu_custom_call.1} parent=11 // pred_check
          %p169 = pneg %p65
        $region14: #{tpu_custom_call.1} parent=11 // pred_check_branch
          %171 = sbr.rel (%p169) target = $region16
        $region15: #{tpu_custom_call.1} parent=11 // pred_region
          %173 = vsyncadd [#allocation6], 0
          %s174 = sshll.u32 %s1, 4
          %s175 = int_to_ptr.hbm [resolvable:$true] %s174
          %s176 = sshll.u32 [#allocation5], 4
          %s177 = int_to_ptr.vmem [resolvable:$true] %s176
          %182 = dma.hbm_to_vmem [thread:$0]  %s175, 256, %s177, [#allocation6], 64, 64, 4
        $region16: #{tpu_custom_call.1} parent=11 // pred_fallthru
          _
        // Predicated region
        $region17: #{tpu_custom_call.1} parent=11 // pred_check
          %p183 = pneg %p86
        $region18: #{tpu_custom_call.1} parent=11 // pred_check_branch
          %185 = sbr.rel (%p183) target = $region20
        $region19: #{tpu_custom_call.1} parent=11 // pred_region
          _
        $region20: #{tpu_custom_call.1} parent=11 // pred_fallthru
          _
        // Predicated region
        $region21: #{tpu_custom_call.1} parent=11 // pred_check
          %p186 = pneg %p107
        $region22: #{tpu_custom_call.1} parent=11 // pred_check_branch
          %188 = sbr.rel (%p186) target = $region24
        $region23: #{tpu_custom_call.1} parent=11 // pred_region
          %190 = vsyncadd [#allocation6], 0
          %s191 = sshll.u32 %s3, 4
          %s192 = int_to_ptr.hbm [resolvable:$true] %s191
          %s193 = sshll.u32 [#allocation7], 4
          %s194 = int_to_ptr.vmem [resolvable:$true] %s193
          %199 = dma.hbm_to_vmem [thread:$0]  %s192, 1024, %s194, [#allocation6], 64, 64, 4
        $region24: #{tpu_custom_call.1} parent=11 // pred_fallthru
          _
        // Predicated region
        $region25: #{tpu_custom_call.1} parent=11 // pred_check
          %p200 = pneg %p128
        $region26: #{tpu_custom_call.1} parent=11 // pred_check_branch
          %202 = sbr.rel (%p200) target = $region28
        $region27: #{tpu_custom_call.1} parent=11 // pred_region
          _
        $region28: #{tpu_custom_call.1} parent=11 // pred_fallthru
          _
      $region12: #{tpu_custom_call.1} parent=5 // pred_fallthru
        _
      %p203 = scmp.lt.s32.totalorder %s18, 2
      // Predicated region
      $region29: #{tpu_custom_call.1} parent=5 // pred_check
        %p204 = pneg %p203
      $region30: #{tpu_custom_call.1} parent=5 // pred_check_branch
        %206 = sbr.rel (%p204) target = $region32
      $region31: #{tpu_custom_call.1} parent=5 // pred_region
        // Predicated region
        $region33: #{tpu_custom_call.1} parent=31 // pred_check
          %p207 = pneg %p38
        $region34: #{tpu_custom_call.1} parent=31 // pred_check_branch
          %209 = sbr.rel (%p207) target = $region36
        $region35: #{tpu_custom_call.1} parent=31 // pred_region
          %s210 = sand.u32 %s28, 1
          %s211 = scalar_lea.sflag [#allocation3], %s210
          %s212 = sand.u32 %s28, 1
          %s213 = smul.addr %s212, 8
          %s214 = scalar_lea.vmem [#allocation2], %s213
          %216 = vsyncadd %s211, 0
          %s217 = smul.addr %s18, 8
          %s218 = scalar_lea.hbm %s0, %s217
          %s220 = sshll.u32 %s218, 4
          %s221 = int_to_ptr.hbm [resolvable:$true] %s220
          %s222 = sshll.u32 %s214, 4
          %s223 = int_to_ptr.vmem [resolvable:$true] %s222
          %225 = dma.hbm_to_vmem [thread:$0]  %s221, 128, %s223, %s211
        $region36: #{tpu_custom_call.1} parent=31 // pred_fallthru
          _
      $region32: #{tpu_custom_call.1} parent=5 // pred_fallthru
        _
      %p226 = scmp.le.s32.totalorder 1, %s18
      %p227 = scmp.lt.s32.totalorder %s18, 3
      %p228 = pnand %p226, %p227
      %p229 = pneg %p228
      // Predicated region
      $region37: #{tpu_custom_call.1} parent=5 // pred_check
        _
      $region38: #{tpu_custom_call.1} parent=5 // pred_check_branch
        %231 = sbr.rel (%p228) target = $region40
      $region39: #{tpu_custom_call.1} parent=5 // pred_region
        %s232 = ssub.s32 %s18, 1
        %s233 = sand.u32 %s31, 1
        %s234 = scalar_lea.sflag [#allocation3], %s233
        %s235 = sand.u32 %s31, 1
        %s236 = smul.addr %s235, 8
        %s237 = scalar_lea.vmem [#allocation2], %s236
        // Predicated region
        $region41: #{tpu_custom_call.1} parent=39 // pred_check
          %p238 = pneg %p44
        $region42: #{tpu_custom_call.1} parent=39 // pred_check_branch
          %240 = sbr.rel (%p238) target = $region44
        $region43: #{tpu_custom_call.1} parent=39 // pred_region
          %242 = dma.done %s234, 128
        $region44: #{tpu_custom_call.1} parent=39 // pred_fallthru
          _
        // Predicated region
        $region45: #{tpu_custom_call.1} parent=39 // pred_check
          %p243 = pneg %p65
        $region46: #{tpu_custom_call.1} parent=39 // pred_check_branch
          %245 = sbr.rel (%p243) target = $region48
        $region47: #{tpu_custom_call.1} parent=39 // pred_region
          %247 = dma.done [#allocation6], 256
        $region48: #{tpu_custom_call.1} parent=39 // pred_fallthru
          _
        // Predicated region
        $region49: #{tpu_custom_call.1} parent=39 // pred_check
          %p248 = pneg %p107
        $region50: #{tpu_custom_call.1} parent=39 // pred_check_branch
          %250 = sbr.rel (%p248) target = $region52
        $region51: #{tpu_custom_call.1} parent=39 // pred_region
          %252 = dma.done [#allocation6], 1024
        $region52: #{tpu_custom_call.1} parent=39 // pred_fallthru
          _
        %s253 = sand.u32 %s31, 1
        %s254 = scalar_lea.sflag [#allocation3], %s253
        %s255 = sand.u32 %s31, 1
        %s256 = smul.addr %s255, 8
        %s257 = scalar_lea.vmem [#allocation2], %s256
        %p258 = pneg %p44
        %p259 = pneg %p41
        %p260 = pneg %p65
        %p261 = pneg %p62
        %p262 = pneg %p86
        %p263 = pneg %p83
        %p264 = pneg %p107
        %p265 = pneg %p104
        %p266 = pneg %p128
        %p267 = pneg %p125
        %p268 = pneg %p154
        %p269 = pneg %p151
        %s270 = sand.u32 %s141, 1
        %s271 = scalar_lea.sflag [#allocation4], %s270
        %s272 = sand.u32 %s141, 1
        %s273 = smul.addr %s272, 8
        %s274 = scalar_lea.vmem [#allocation8], %s273
        %v276 = vld [vmem:[%s237] sm:$0xff]
        %v277 = vpack.c.bf16 %v276, %v276
        %v278 = vld [vmem:[#allocation5] sm:$0xf]
        %v279 = vld [vmem:[#allocation5 + $0x4] sm:$0xf]
        %v280 = vld [vmem:[#allocation5 + $0x8] sm:$0xf]
        %v281 = vld [vmem:[#allocation5 + $0xc] sm:$0xf]
        %v282 = vld [vmem:[%s2] sm:$0x1]
        %v284 = vperm.slane %v282, 0
        %v290 = vunpack.c.l.b16 %v278
        %v291 = vunpack.c.l.b16 %v279
        %v292 = vunpack.c.l.b16 %v280
        %v293 = vunpack.c.l.b16 %v281
        %v294 = vpack.c.b16 %v291, %v290
        %v295 = vpack.c.b16 %v293, %v292
        %vm298 = vcmask 261120
        %v300 = vsel %vm298, %v277, 0
        %302 = vmatpush.bf16.msra.mxu0 0
        %303 = vmatpush.bf16.msra.mxu0 0
        %304 = vmatpush.bf16.msra.mxu0 0
        %305 = vmatpush.bf16.msra.mxu0 0
        %306 = vmatpush.bf16.msra.mxu0 0
        %307 = vmatpush.bf16.msra.mxu0 0
        %308 = vmatpush.bf16.msra.mxu0 %v295
        %309 = vmatpush.bf16.msra.mxu0 %v294
        %310 = vmatmul.bf16.gmra.mxu0 %v300
        %v311 = vpop.f32.mrf.mxu0
        %v312 = vadd.f32 %v284, %v311
        %v313 = vpop.f32.mrf.mxu0
        %314 = vdwg.mxu0
        %vm315 = vcmp.gt.f32.partialorder %v312, 0.0
        %v316 = vmul.f32 %v312, 0.01
        %v317 = vsel %vm315, %v312, %v316
        %v318 = vpack.c.bf16 %v317, %v317
        %v319 = vld [vmem:[#allocation7] sm:$0xf]
        %v320 = vld [vmem:[#allocation7 + $0x4] sm:$0xf]
        %v321 = vld [vmem:[#allocation7 + $0x8] sm:$0xf]
        %v322 = vld [vmem:[#allocation7 + $0xc] sm:$0xf]
        %v323 = vld [vmem:[#allocation7 + $0x10] sm:$0xf]
        %v324 = vld [vmem:[#allocation7 + $0x14] sm:$0xf]
        %v325 = vld [vmem:[#allocation7 + $0x18] sm:$0xf]
        %v326 = vld [vmem:[#allocation7 + $0x1c] sm:$0xf]
        %v327 = vld [vmem:[#allocation7 + $0x20] sm:$0xf]
        %v328 = vld [vmem:[#allocation7 + $0x24] sm:$0xf]
        %v329 = vld [vmem:[#allocation7 + $0x28] sm:$0xf]
        %v330 = vld [vmem:[#allocation7 + $0x2c] sm:$0xf]
        %v331 = vld [vmem:[#allocation7 + $0x30] sm:$0xf]
        %v332 = vld [vmem:[#allocation7 + $0x34] sm:$0xf]
        %v333 = vld [vmem:[#allocation7 + $0x38] sm:$0xf]
        %v334 = vld [vmem:[#allocation7 + $0x3c] sm:$0xf]
        %v335 = vld [vmem:[%s4] sm:$0x1]
        %v337 = vperm.slane %v335, 0
        %v355 = vunpack.c.l.b16 %v319
        %v356 = vunpack.c.l.b16 %v320
        %v357 = vunpack.c.l.b16 %v321
        %v358 = vunpack.c.l.b16 %v322
        %v359 = vunpack.c.l.b16 %v323
        %v360 = vunpack.c.l.b16 %v324
        %v361 = vunpack.c.l.b16 %v325
        %v362 = vunpack.c.l.b16 %v326
        %v363 = vunpack.c.l.b16 %v327
        %v364 = vunpack.c.l.b16 %v328
        %v365 = vunpack.c.l.b16 %v329
        %v366 = vunpack.c.l.b16 %v330
        %v367 = vunpack.c.l.b16 %v331
        %v368 = vunpack.c.l.b16 %v332
        %v369 = vunpack.c.l.b16 %v333
        %v370 = vunpack.c.l.b16 %v334
        %v371 = vpack.c.b16 %v356, %v355
        %v372 = vpack.c.b16 %v358, %v357
        %v373 = vpack.c.b16 %v360, %v359
        %v374 = vpack.c.b16 %v362, %v361
        %v375 = vpack.c.b16 %v364, %v363
        %v376 = vpack.c.b16 %v366, %v365
        %v377 = vpack.c.b16 %v368, %v367
        %v378 = vpack.c.b16 %v370, %v369
        %387 = vmatpush.bf16.msra.mxu0 %v378
        %388 = vmatpush.bf16.msra.mxu0 %v377
        %389 = vmatpush.bf16.msra.mxu0 %v376
        %390 = vmatpush.bf16.msra.mxu0 %v375
        %391 = vmatpush.bf16.msra.mxu0 %v374
        %392 = vmatpush.bf16.msra.mxu0 %v373
        %393 = vmatpush.bf16.msra.mxu0 %v372
        %394 = vmatpush.bf16.msra.mxu0 %v371
        %395 = vmatmul.bf16.gmra.mxu0 %v318
        %v396 = vpop.f32.mrf.mxu0
        %v397 = vadd.f32 %v337, %v396
        %v398 = vpop.f32.mrf.mxu0
        %399 = vdwg.mxu0
        %v400 = vlaneseq
        %v401 = vand.u32 %v400, 127
        %v402 = vlaneseq
        %v403 = vshrl.u32 %v402, 7
        %v404 = vadd.s32 %v403, 8
        %v405 = vadd.s32 %v403, 16
        %v406 = vadd.s32 %v403, 24
        %v407 = vadd.s32 %v403, 32
        %v408 = vadd.s32 %v403, 40
        %v409 = vadd.s32 %v403, 48
        %v410 = vadd.s32 %v403, 56
        %v411 = vadd.s32 %v403, 64
        %v412 = vadd.s32 %v403, 72
        %v413 = vadd.s32 %v403, 80
        %v414 = vadd.s32 %v403, 88
        %v415 = vadd.s32 %v403, 96
        %v416 = vadd.s32 %v403, 104
        %v417 = vadd.s32 %v403, 112
        %v418 = vadd.s32 %v403, 120
        %v419 = vmul.u32 %v401, 6
        %v420 = vadd.s32 %v419, 18
        %vm421 = vcmp.ge.s32.totalorder %v403, %v420
        %vm422 = vcmp.ge.s32.totalorder %v404, %v420
        %vm423 = vcmp.ge.s32.totalorder %v405, %v420
        %vm424 = vcmp.ge.s32.totalorder %v406, %v420
        %vm425 = vcmp.ge.s32.totalorder %v407, %v420
        %vm426 = vcmp.ge.s32.totalorder %v408, %v420
        %vm427 = vcmp.ge.s32.totalorder %v409, %v420
        %vm428 = vcmp.ge.s32.totalorder %v410, %v420
        %vm429 = vcmp.ge.s32.totalorder %v411, %v420
        %vm430 = vcmp.ge.s32.totalorder %v412, %v420
        %vm431 = vcmp.ge.s32.totalorder %v413, %v420
        %vm432 = vcmp.ge.s32.totalorder %v414, %v420
        %vm433 = vcmp.ge.s32.totalorder %v415, %v420
        %vm434 = vcmp.ge.s32.totalorder %v416, %v420
        %vm435 = vcmp.ge.s32.totalorder %v417, %v420
        %vm436 = vcmp.ge.s32.totalorder %v418, %v420
        %v437 = vadd.s32 %v420, 6
        %vm438 = vcmp.lt.s32.totalorder %v403, %v437
        %vm439 = vcmp.lt.s32.totalorder %v404, %v437
        %vm440 = vcmp.lt.s32.totalorder %v405, %v437
        %vm441 = vcmp.lt.s32.totalorder %v406, %v437
        %vm442 = vcmp.lt.s32.totalorder %v407, %v437
        %vm443 = vcmp.lt.s32.totalorder %v408, %v437
        %vm444 = vcmp.lt.s32.totalorder %v409, %v437
        %vm445 = vcmp.lt.s32.totalorder %v410, %v437
        %vm446 = vcmp.lt.s32.totalorder %v411, %v437
        %vm447 = vcmp.lt.s32.totalorder %v412, %v437
        %vm448 = vcmp.lt.s32.totalorder %v413, %v437
        %vm449 = vcmp.lt.s32.totalorder %v414, %v437
        %vm450 = vcmp.lt.s32.totalorder %v415, %v437
        %vm451 = vcmp.lt.s32.totalorder %v416, %v437
        %vm452 = vcmp.lt.s32.totalorder %v417, %v437
        %vm453 = vcmp.lt.s32.totalorder %v418, %v437
        %vm454 = vmand %vm421, %vm438
        %vm455 = vmand %vm422, %vm439
        %vm456 = vmand %vm423, %vm440
        %vm457 = vmand %vm424, %vm441
        %vm458 = vmand %vm425, %vm442
        %vm459 = vmand %vm426, %vm443
        %vm460 = vmand %vm427, %vm444
        %vm461 = vmand %vm428, %vm445
        %vm462 = vmand %vm429, %vm446
        %vm463 = vmand %vm430, %vm447
        %vm464 = vmand %vm431, %vm448
        %vm465 = vmand %vm432, %vm449
        %vm466 = vmand %vm433, %vm450
        %vm467 = vmand %vm434, %vm451
        %vm468 = vmand %vm435, %vm452
        %vm469 = vmand %vm436, %vm453
        %vm470 = vcmp.lt.s32.totalorder %v401, 3
        %vm471 = vmand %vm454, %vm470
        %vm472 = vmand %vm455, %vm470
        %vm473 = vmand %vm456, %vm470
        %vm474 = vmand %vm457, %vm470
        %vm475 = vmand %vm458, %vm470
        %vm476 = vmand %vm459, %vm470
        %vm477 = vmand %vm460, %vm470
        %vm478 = vmand %vm461, %vm470
        %vm479 = vmand %vm462, %vm470
        %vm480 = vmand %vm463, %vm470
        %vm481 = vmand %vm464, %vm470
        %vm482 = vmand %vm465, %vm470
        %vm483 = vmand %vm466, %vm470
        %vm484 = vmand %vm467, %vm470
        %vm485 = vmand %vm468, %vm470
        %vm486 = vmand %vm469, %vm470
        %v487 = vsel %vm471, 1, 0
        %v488 = vsel %vm472, 1, 0
        %v489 = vsel %vm473, 1, 0
        %v490 = vsel %vm474, 1, 0
        %v491 = vsel %vm475, 1, 0
        %v492 = vsel %vm476, 1, 0
        %v493 = vsel %vm477, 1, 0
        %v494 = vsel %vm478, 1, 0
        %v495 = vsel %vm479, 1, 0
        %v496 = vsel %vm480, 1, 0
        %v497 = vsel %vm481, 1, 0
        %v498 = vsel %vm482, 1, 0
        %v499 = vsel %vm483, 1, 0
        %v500 = vsel %vm484, 1, 0
        %v501 = vsel %vm485, 1, 0
        %v502 = vsel %vm486, 1, 0
        %v503 = vcvt.s32.f32 %v487
        %v504 = vcvt.s32.f32 %v488
        %v505 = vcvt.s32.f32 %v489
        %v506 = vcvt.s32.f32 %v490
        %v507 = vcvt.s32.f32 %v491
        %v508 = vcvt.s32.f32 %v492
        %v509 = vcvt.s32.f32 %v493
        %v510 = vcvt.s32.f32 %v494
        %v511 = vcvt.s32.f32 %v495
        %v512 = vcvt.s32.f32 %v496
        %v513 = vcvt.s32.f32 %v497
        %v514 = vcvt.s32.f32 %v498
        %v515 = vcvt.s32.f32 %v499
        %v516 = vcvt.s32.f32 %v500
        %v517 = vcvt.s32.f32 %v501
        %v518 = vcvt.s32.f32 %v502
        %v519 = vmul.u32 %v403, 6
        %v520 = vadd.s32 %v519, 18
        %vm521 = vcmp.ge.s32.totalorder %v401, %v520
        %v522 = vadd.s32 %v520, 6
        %vm523 = vcmp.lt.s32.totalorder %v401, %v522
        %vm524 = vmand %vm521, %vm523
        %vm525 = vcmp.lt.s32.totalorder %v403, 3
        %vm526 = vmand %vm524, %vm525
        %v527 = vsel %vm526, 1, 0
        %v528 = vcvt.s32.f32 %v527
        %vm529 = vcmp.ge.s32.totalorder %v401, 18
        %vm530 = vcmp.lt.s32.totalorder %v401, 24
        %vm531 = vmand %vm529, %vm530
        %v532 = vsel %vm531, %v397, -3e+38
        %533 = vmax.xlane.f32.xlu0 %v532
        %v534 = vpop.xlane.xlu0 %533
        %v535 = vsel %vm531, %v534, 0.0
        %vm536 = vcmp.ge.s32.totalorder %v401, 24
        %vm537 = vcmp.lt.s32.totalorder %v401, 30
        %vm538 = vmand %vm536, %vm537
        %v539 = vsel %vm538, %v397, -3e+38
        %540 = vmax.xlane.f32.xlu0 %v539
        %v541 = vpop.xlane.xlu0 %540
        %v542 = vsel %vm538, %v541, %v535
        %vm543 = vcmp.ge.s32.totalorder %v401, 30
        %vm544 = vcmp.lt.s32.totalorder %v401, 36
        %vm545 = vmand %vm543, %vm544
        %v546 = vsel %vm545, %v397, -3e+38
        %547 = vmax.xlane.f32.xlu0 %v546
        %v548 = vpop.xlane.xlu0 %547
        %v549 = vsel %vm545, %v548, %v542
        %v550 = vsub.f32 %v397, %v549
        %v551 = vmul.f32 %v550, 1.442695
        %v552 = vpow.pop %v551
        %v553 = vsel %vm529, %v552, 0.0
        %554 = vmatpush.msra.mxu0 %v518
        %555 = vmatpush.msra.mxu0 %v517
        %556 = vmatpush.msra.mxu0 %v516
        %557 = vmatpush.msra.mxu0 %v515
        %558 = vmatpush.msra.mxu0 %v514
        %559 = vmatpush.msra.mxu0 %v513
        %560 = vmatpush.msra.mxu0 %v512
        %561 = vmatpush.msra.mxu0 %v511
        %562 = vmatpush.msra.mxu0 %v510
        %563 = vmatpush.msra.mxu0 %v509
        %564 = vmatpush.msra.mxu0 %v508
        %565 = vmatpush.msra.mxu0 %v507
        %566 = vmatpush.msra.mxu0 %v506
        %567 = vmatpush.msra.mxu0 %v505
        %568 = vmatpush.msra.mxu0 %v504
        %569 = vmatpush.msra.mxu0 %v503
        %570 = vmatmul.f32.gmra.mxu0 %v553
        %v571 = vpop.f32.mrf.mxu0
        %v572 = vadd.f32 0.0, %v571
        %573 = vdwg.mxu0
        %v574 = vmax.f32 %v572, 1e-30
        %v575 = vlog2.pop %v574
        %v576 = vmul.f32 %v575, 0.6931472
        %vm577 = vcmask 64512
        %v579 = vsel %vm577, %v576, 0
        %581 = vmatpush.msra.mxu0 0.0
        %582 = vmatpush.msra.mxu0 0.0
        %583 = vmatpush.msra.mxu0 0.0
        %584 = vmatpush.msra.mxu0 0.0
        %585 = vmatpush.msra.mxu0 0.0
        %586 = vmatpush.msra.mxu0 0.0
        %587 = vmatpush.msra.mxu0 0.0
        %588 = vmatpush.msra.mxu0 0.0
        %589 = vmatpush.msra.mxu0 0.0
        %590 = vmatpush.msra.mxu0 0.0
        %591 = vmatpush.msra.mxu0 0.0
        %592 = vmatpush.msra.mxu0 0.0
        %593 = vmatpush.msra.mxu0 0.0
        %594 = vmatpush.msra.mxu0 0.0
        %595 = vmatpush.msra.mxu0 0.0
        %596 = vmatpush.msra.mxu0 %v528
        %597 = vmatmul.f32.gmra.mxu0 %v579
        %v598 = vpop.f32.mrf.mxu0
        %v599 = vadd.f32 0.0, %v598
        %600 = vdwg.mxu0
        %v601 = vsub.f32 %v550, %v599
        %602 = vst [vmem:[%s274] sm:$0xff] %v601
        %s603 = sand.u32 %s141, 1
        %s604 = scalar_lea.sflag [#allocation4], %s603
        %s605 = sand.u32 %s141, 1
        %s606 = smul.addr %s605, 8
        %s607 = scalar_lea.vmem [#allocation8], %s606
        // Predicated region
        $region53: #{tpu_custom_call.1} parent=39 // pred_check
          %p608 = pneg %p151
        $region54: #{tpu_custom_call.1} parent=39 // pred_check_branch
          %610 = sbr.rel (%p608) target = $region56
        $region55: #{tpu_custom_call.1} parent=39 // pred_region
          %612 = vsyncadd %s604, 0
          %s613 = smul.addr %s23, 8
          %s614 = scalar_lea.hbm %s5, %s613
          %s616 = sshll.u32 %s607, 4
          %s617 = int_to_ptr.vmem [resolvable:$true] %s616
          %s618 = sshll.u32 %s614, 4
          %s619 = int_to_ptr.hbm [resolvable:$true] %s618
          %621 = dma.vmem_to_hbm [thread:$0]  %s617, 128, %s619, %s604
        $region56: #{tpu_custom_call.1} parent=39 // pred_fallthru
          _
      $region40: #{tpu_custom_call.1} parent=5 // pred_fallthru
        _
      %p622 = scmp.le.s32.totalorder 2, %s18
      // Predicated region
      $region57: #{tpu_custom_call.1} parent=5 // pred_check
        %p623 = pneg %p622
      $region58: #{tpu_custom_call.1} parent=5 // pred_check_branch
        %625 = sbr.rel (%p623) target = $region60
      $region59: #{tpu_custom_call.1} parent=5 // pred_region
        %s626 = ssub.s32 %s18, 2
        // Predicated region
        $region61: #{tpu_custom_call.1} parent=59 // pred_check
          %p627 = pneg %p157
        $region62: #{tpu_custom_call.1} parent=59 // pred_check_branch
          %629 = sbr.rel (%p627) target = $region64
        $region63: #{tpu_custom_call.1} parent=59 // pred_region
          %s630 = sand.u32 %s142, 1
          %s631 = scalar_lea.sflag [#allocation4], %s630
          %s632 = sand.u32 %s142, 1
          %s633 = smul.addr %s632, 8
          %s634 = scalar_lea.vmem [#allocation8], %s633
          %636 = dma.done %s631, 128
        $region64: #{tpu_custom_call.1} parent=59 // pred_fallthru
          _
      $region60: #{tpu_custom_call.1} parent=5 // pred_fallthru
        _
    $region6: #{tpu_custom_call.1} parent=1 // loop_footer
      %s22 = sadd.s32 1, %s18
    $region7: #{tpu_custom_call.1} parent=1 // loop_footer_branch
      %17 = sbr.rel target = $region3
    $region8: #{tpu_custom_call.1} parent=1 // loop_exit
      _
    %637 = vsyncpa [#allocation3], 1
    %s638 = scalar_lea.sflag [#allocation3], 1
    %639 = vsyncpa %s638, 1
    %640 = vsyncpa [#allocation6], 1
    %641 = vsyncpa [#allocation4], 1
    %s642 = scalar_lea.sflag [#allocation4], 1
    %643 = vsyncpa %s642, 1

</llo_original>
